<compile_context>
chip_gen: v6e
topology: v6e:2x2x1
jax: 0.10.0
libtpu: 0.0.40
codegen_flags: <defaults>
</compile_context>

<pallas_src>
import functools
import math

import jax
import jax.numpy as jnp
from jax import lax
from jax.experimental import pallas as pl
from jax.experimental.pallas import tpu as pltpu

EPS_BISECT = 0.1          # eps_threshold of FIND_MIN
LANE_TILE = 128


# ----------------------------- math helpers (lane-vectorized) ----------------


def _xi_from_logs(omega, log_omega_p, omega_hat):
    """xi(omega) of the reference (bbox_loss with its fixed default beta=1)."""
    x = (omega - omega_hat) * 0.5
    dx = jnp.abs(x)
    l1 = jnp.where(dx < 1.0, 0.5 * dx * dx, dx - 0.5)
    dl = jnp.abs(jnp.log(omega) - log_omega_p)
    l2 = jnp.where(dl < 1.0, 0.5 * dl * dl, dl - 0.5)
    return l1 + l2


def _bisect_batched(u0, v0, omega_p, omega_hat, is_sigma, *, beta, iters):
    """Batched FIND_MIN: all stacked bisection problems share one loop.

    Objective is xi' on rows with is_sigma=False and sigma = omega * xi' on
    rows with is_sigma=True.  The recursion of the reference is replaced by a
    fixed-trip bisection whose interval is frozen once converged (v-u < eps),
    so the returned midpoint matches FIND_MIN (within its own tolerance).
    """
    inv_beta = 1.0 / beta
    log_op = jnp.log(omega_p)                  # hoisted: loop-invariant

    def obj(m):
        xp = (0.5 * jnp.clip((m - omega_hat) * (0.5 * inv_beta), -1.0, 1.0)
              + jnp.clip((jnp.log(m) - log_op) * inv_beta, -1.0, 1.0)
              * pl.reciprocal(m, approx=True))
        return jnp.where(is_sigma, m * xp, xp)

    fu = obj(u0)
    fv = obj(v0)
    ret_u = fu >= 0.0
    ret_v = jnp.logical_and(jnp.logical_not(ret_u), fv <= 0.0)
    done0 = jnp.logical_or(ret_u, ret_v)
    res0 = jnp.where(ret_u, u0, v0)
    # Collapse already-decided problems to a zero-width interval: the loop then
    # freezes them immediately and the final midpoint equals res0 exactly.
    u = jnp.where(done0, res0, u0)
    v = jnp.where(done0, res0, v0)

    def body(_, uv):
        u, v = uv
        stop = (v - u) < EPS_BISECT
        m = (u + v) * 0.5
        go_left = obj(m) >= 0.0
        u_new = jnp.where(go_left, u, m)
        v_new = jnp.where(go_left, m, v)
        return (jnp.where(stop, u, u_new), jnp.where(stop, v, v_new))

    u, v = lax.fori_loop(0, iters, body, (u, v))
    return (u + v) * 0.5


def _solve_o1_batched(omega_p, omega_hat, a1, b1, *, beta, iters):
    """Vectorized SOLVE_O1 over K stacked instances, each of shape (K, L).

    Builds 6 FIND_MIN problems per instance, runs them in ONE shared bisection
    over a (6K, L) stack, then does the reference's ordered 7-candidate xi
    argmin in batch.  Returns (omega_star, xi(omega_star)).
    """
    K = omega_p.shape[0]
    omega_0 = b1 - a1
    cond_a = jnp.maximum(omega_0, omega_hat) < omega_p
    cond_b = jnp.maximum(omega_0, omega_p) < omega_hat

    e_beta = math.exp(beta)
    e_min_b1 = math.exp(min(beta, 1.0))
    two_sqrt_beta = 2.0 * math.sqrt(beta)

    # six FIND_MIN problems per instance: branch-A interval and J1..J5
    u_a = jnp.maximum(omega_0, omega_hat)
    v_a = omega_p
    u_1 = jnp.maximum(omega_0, omega_p)
    v_1 = jnp.minimum(e_min_b1 * omega_p, omega_hat)
    u_2 = jnp.maximum(jnp.maximum(omega_0, two_sqrt_beta),
                      jnp.maximum(omega_hat - 2.0 * beta, e_beta * omega_p))
    v_2 = omega_hat
    u_345 = jnp.maximum(jnp.maximum(omega_0, omega_hat - 2.0 * beta),
                        math.e * omega_p)
    v_3 = jnp.minimum(e_beta, omega_hat)
    disc = jnp.sqrt(jnp.maximum(1.0 - 32.0 / (omega_hat * omega_hat), 0.0))
    v_4 = jnp.minimum(jnp.minimum(e_beta * omega_p, omega_hat),
                      0.25 * omega_hat * (1.0 + disc))
    u_5 = jnp.maximum(u_345, 0.25 * omega_hat * (1.0 - disc))
    v_5 = jnp.minimum(e_beta * omega_p, omega_hat)

    U = jnp.concatenate([u_a, u_1, u_2, u_345, u_345, u_5], axis=0)   # (6K, L)
    V = jnp.concatenate([v_a, v_1, v_2, v_3, v_4, v_5], axis=0)
    OP = jnp.concatenate([omega_p] * 6, axis=0)
    OH = jnp.concatenate([omega_hat] * 6, axis=0)
    # problems A/J1/J2 use xi', J3/J4/J5 use sigma
    is_sigma = lax.broadcasted_iota(jnp.int32, U.shape, 0) >= 3 * K

    R = _bisect_batched(U, V, OP, OH, is_sigma, beta=beta, iters=iters)
    res_a = R[0:K]
    c1, c2, c3 = R[K:2 * K], R[2 * K:3 * K], R[3 * K:4 * K]
    c4, c5 = R[4 * K:5 * K], R[5 * K:6 * K]

    # batched 7-candidate xi evaluation + ordered argmin (first min wins,
    # matching torch.argmin on the reference's candidate list order)
    cands = jnp.concatenate([omega_0, omega_hat, c1, c2, c3, c4, c5], axis=0)
    log_op = jnp.log(omega_p)
    xis = _xi_from_logs(cands,
                        jnp.concatenate([log_op] * 7, axis=0),
                        jnp.concatenate([omega_hat] * 7, axis=0))

    small = omega_hat <= 4.0 * math.sqrt(2.0)
    not_small = jnp.logical_not(small)
    always = jnp.ones_like(small)
    valids = (always, always, always, small, not_small, not_small)

    best_om = cands[0:K]          # omega_0 is the baseline candidate
    best_xi = xis[0:K]
    for idx, valid in enumerate(valids, start=1):
        cand = cands[idx * K:(idx + 1) * K]
        cxi = xis[idx * K:(idx + 1) * K]
        take = jnp.logical_and(valid, cxi < best_xi)
        best_om = jnp.where(take, cand, best_om)
        best_xi = jnp.where(take, cxi, best_xi)

    omega_star = jnp.where(cond_a, res_a, jnp.where(cond_b, best_om, omega_0))
    xi_star = _xi_from_logs(omega_star, log_op, omega_hat)
    return omega_star, xi_star


# ------------------------------- Pallas kernel --------------------------------


def _cabb_kernel(pred_ref, prop_ref, gt_ref, cases_ref, cs_ref, loss_ref, *,
                 beta, iters):
    p = pred_ref[...]
    prop = prop_ref[...]
    gt = gt_ref[...]
    cases = cases_ref[...]
    cs = cs_ref[...]

    def r(a, i):
        return a[i:i + 1, :]          # (1, LANE_TILE) row slice

    # bbox2delta (legacy mmdet +1 w/h convention, means=0, stds=1)
    px = (r(prop, 0) + r(prop, 2)) * 0.5
    py = (r(prop, 1) + r(prop, 3)) * 0.5
    pw = r(prop, 2) - r(prop, 0) + 1.0
    ph = r(prop, 3) - r(prop, 1) + 1.0
    gx = (r(gt, 0) + r(gt, 2)) * 0.5
    gy = (r(gt, 1) + r(gt, 3)) * 0.5
    gw = r(gt, 2) - r(gt, 0) + 1.0
    gh = r(gt, 3) - r(gt, 1) + 1.0

    tdx = (gx - px) / pw
    tdy = (gy - py) / ph
    t_w = gw / pw                 # forward applies exp() to log-w/h targets
    t_h = gh / ph

    pdx = r(p, 0)
    pdy = r(p, 1)
    pwp = jnp.exp(r(p, 2))        # forward: pred[:, [2,3]] = exp(pred[:, [2,3]])
    php = jnp.exp(r(p, 3))
    pwp = jnp.where(pwp <= 0.0, 1e-6, jnp.minimum(pwp, 1e10))
    php = jnp.where(php <= 0.0, 1e-6, jnp.minimum(php, 1e10))

    def axis_params(pred_d, pred_o, targ_d, targ_o, prop_lo, prop_hi, crop_s):
        ca = 0.5 * (prop_lo + prop_hi) + 0.5
        da = prop_hi - prop_lo + 1.0
        a1_r = targ_d - 0.5 * targ_o          # right/bottom side cropped only
        b1_r = (crop_s - ca) / da
        hat_r = 2.0 * (pred_d - a1_r)
        a1_l = -ca / da                       # left/top side cropped only
        b1_l = targ_d + 0.5 * targ_o
        hat_l = 2.0 * (b1_l - pred_d)
        hat1 = 2.0 * (pred_d - a1_l)          # both sides cropped (SOLVE_O2)
        hat2 = 2.0 * (b1_r - pred_d)
        ops = (pred_o, pred_o, pred_o, pred_o)
        ohs = (hat_r, hat_l, hat1, hat2)
        a1s = (a1_r, a1_l, a1_l, a1_l)
        b1s = (b1_r, b1_l, b1_r, b1_r)
        aux = (a1_r, b1_l, a1_l, b1_r, hat1, hat2)
        return ops, ohs, a1s, b1s, aux

    ops_x, ohs_x, a1s_x, b1s_x, aux_x = axis_params(
        pdx, pwp, tdx, t_w, r(prop, 0), r(prop, 2), r(cs, 0))
    ops_y, ohs_y, a1s_y, b1s_y, aux_y = axis_params(
        pdy, php, tdy, t_h, r(prop, 1), r(prop, 3), r(cs, 1))

    # 8 stacked SOLVE_O1 instances: x[right, left, o2a, o2b], y[right, left, o2a, o2b]
    op_s = jnp.concatenate(ops_x + ops_y, axis=0)   # (8, L)
    oh_s = jnp.concatenate(ohs_x + ohs_y, axis=0)
    a1_s = jnp.concatenate(a1s_x + a1s_y, axis=0)
    b1_s = jnp.concatenate(b1s_x + b1s_y, axis=0)

    om_s, xi_s = _solve_o1_batched(op_s, oh_s, a1_s, b1_s, beta=beta,
                                   iters=iters)

    def axis_labels(base, pred_d, pred_o, targ_d, targ_o, case_lo, case_hi, aux):
        a1_r, b1_l, a2, b2, hat1, hat2 = aux
        om_r = om_s[base + 0:base + 1]
        om_l = om_s[base + 1:base + 2]
        om_o1 = om_s[base + 2:base + 3]
        om_o2 = om_s[base + 3:base + 4]
        del_r = a1_r + 0.5 * om_r
        del_l = b1_l - 0.5 * om_l
        # SOLVE_O2 combine (xi of each branch's result was computed in batch)
        pick1 = xi_s[base + 2:base + 3] <= xi_s[base + 3:base + 4]
        del_b = jnp.where(pick1, a2 + 0.5 * om_o1, b2 - 0.5 * om_o2)
        om_b = jnp.where(pick1, om_o1, om_o2)
        trivial = pred_o >= jnp.maximum(hat1, hat2)
        del_b = jnp.where(trivial, pred_d, del_b)
        om_b = jnp.where(trivial, pred_o, om_b)
        # crop-case selection
        left = case_lo > 0.5
        right = case_hi > 0.5
        none_c = jnp.logical_and(jnp.logical_not(left), jnp.logical_not(right))
        ronly = jnp.logical_and(jnp.logical_not(left), right)
        lonly = jnp.logical_and(left, jnp.logical_not(right))
        delta_lab = jnp.where(none_c, targ_d,
                    jnp.where(ronly, del_r,
                    jnp.where(lonly, del_l, del_b)))
        omega_lab = jnp.where(none_c, targ_o,
                    jnp.where(ronly, om_r,
                    jnp.where(lonly, om_l, om_b)))
        return delta_lab, omega_lab

    lab_dx, lab_w = axis_labels(0, pdx, pwp, tdx, t_w,
                                r(cases, 0), r(cases, 1), aux_x)
    lab_dy, lab_h = axis_labels(4, pdy, php, tdy, t_h,
                                r(cases, 2), r(cases, 3), aux_y)

    # final smooth-L1 on stacked rows; single unmasked (8, L) store
    logs = jnp.log(jnp.concatenate([pwp, php, lab_w, lab_h], axis=0))  # (4, L)
    pred_rows = jnp.concatenate([pdx, pdy, logs[0:1], logs[1:2]], axis=0)
    lab_rows = jnp.concatenate([lab_dx, lab_dy, logs[2:3], logs[3:4]], axis=0)
    d = jnp.abs(pred_rows - lab_rows)
    li = jnp.where(d < beta, d * d * (0.5 / beta), d - 0.5 * beta)
    cap_rows = lax.broadcasted_iota(jnp.int32, li.shape, 0) >= 2
    li = jnp.where(jnp.logical_and(cap_rows, li >= 100.0), 100.0, li)
    loss_ref[...] = jnp.concatenate(
        [li, jnp.zeros((4, li.shape[1]), jnp.float32)], axis=0)


# --------------------------------- wrapper ------------------------------------


def cabb_loss(pred, proposal_list, orig_gt_left_top, cases, crop_shapes,
              beta=1.0, loss_weight=1.0, reduction="mean"):
    """JAX/Pallas equivalent of cabb.forward (weight=None, avg_factor=None)."""
    assert beta > 0
    n = pred.shape[0]
    n_pad = -(-n // LANE_TILE) * LANE_TILE
    n_pad = max(n_pad, 2 * LANE_TILE)   # >=2 grid steps: megacore sharding (v7x)

    # bisection depth: omega_p is capped at 1e10, so every FIND_MIN interval is
    # <= e^beta * 1e10 wide; with eps = 0.1 ~38 halvings suffice (+2 margin).
    iters = int(math.ceil(
        math.log2(math.exp(max(beta, 1.0)) * 1e10 / EPS_BISECT))) + 2

    def pack(x, pad_row):
        x = jnp.asarray(x, jnp.float32)
        cols = x.shape[1]
        pad_block = jnp.broadcast_to(
            jnp.asarray(pad_row, jnp.float32)[None, :], (n_pad - n, cols))
        x = jnp.concatenate([x, pad_block], axis=0).T          # (cols, n_pad)
        return jnp.pad(x, ((0, 8 - cols), (0, 0)))

    # Padded lanes get benign, uncropped geometry so the vectorized solver
    # stays finite there; their results are sliced off below.
    pred_p = pack(pred, (0.0, 0.0, 0.0, 0.0))
    prop_p = pack(proposal_list, (0.0, 0.0, 10.0, 10.0))
    gt_p = pack(orig_gt_left_top, (2.0, 2.0, 8.0, 8.0))
    cases_p = pack(cases, (0.0, 0.0, 0.0, 0.0))
    cs_p = pack(crop_shapes, (100.0, 100.0))

    spec = pl.BlockSpec((8, LANE_TILE), lambda i: (0, i))
    out = pl.pallas_call(
        functools.partial(_cabb_kernel, beta=float(beta), iters=iters),
        out_shape=jax.ShapeDtypeStruct((8, n_pad), jnp.float32),
        grid_spec=pltpu.PrefetchScalarGridSpec(
            num_scalar_prefetch=0,
            grid=(n_pad // LANE_TILE,),
            in_specs=[spec, spec, spec, spec, spec],
            out_specs=spec,
        ),
        compiler_params=pltpu.CompilerParams(
            dimension_semantics=("parallel",)),
    )(pred_p, prop_p, gt_p, cases_p, cs_p)

    losses = out[:4, :n].T            # (N, 4) per-element smooth-L1 losses
    if reduction == "mean":
        red = losses.mean()
    elif reduction == "sum":
        red = losses.sum()
    else:
        red = losses
    return loss_weight * red


# ----------------------------------- main --------------------------------------


if __name__ == "__main__":
    key = jax.random.PRNGKey(0)
    N = 8
    k1, k2, k3, k4, k5, k6, k7 = jax.random.split(key, 7)

    # proposals (x1, y1, x2, y2) inside a 128x128 crop
    cx = jax.random.uniform(k1, (N,), minval=30.0, maxval=90.0)
    cy = jax.random.uniform(k2, (N,), minval=30.0, maxval=90.0)
    w = jax.random.uniform(k3, (N,), minval=10.0, maxval=40.0)
    h = jax.random.uniform(k4, (N,), minval=10.0, maxval=40.0)
    proposals = jnp.stack([cx - 0.5 * w, cy - 0.5 * h,
                           cx + 0.5 * w, cy + 0.5 * h], axis=1)

    # original (pre-crop) ground-truth boxes ≈ proposals + jitter
    gt_boxes = proposals + jax.random.uniform(k5, (N, 4), minval=-6.0, maxval=6.0)

    # predicted deltas (dx, dy, log dw, log dh)
    pred = 0.2 * jax.random.normal(k6, (N, 4), dtype=jnp.float32)

    # crop cases: [left-x cropped, right-x cropped, top-y cropped, bottom-y cropped]
    cases = (jax.random.uniform(k7, (N, 4)) < 0.4).astype(jnp.float32)

    # crop window shapes (width, height) per box
    crop_shapes = jnp.full((N, 2), 128.0, jnp.float32)

    loss = cabb_loss(pred, proposals, gt_boxes, cases, crop_shapes,
                     beta=1.0, loss_weight=1.0, reduction="mean")
    jax.block_until_ready(loss)
    print("KERNEL_OK")
</pallas_src>

<mosaic_0001>
module attributes {stable_mosaic.version = 11 : i64} {
  func.func @_cabb_kernel(%arg0: i32, %arg1: memref<8x128xf32, #tpu.memory_space<vmem>>, %arg2: memref<8x128xf32, #tpu.memory_space<vmem>>, %arg3: memref<8x128xf32, #tpu.memory_space<vmem>>, %arg4: memref<8x128xf32, #tpu.memory_space<vmem>>, %arg5: memref<8x128xf32, #tpu.memory_space<vmem>>, %arg6: memref<8x128xf32, #tpu.memory_space<vmem>>) attributes {dimension_semantics = [#tpu.dimension_semantics<parallel>], iteration_bounds = array<i64: 2>, scalar_prefetch = 0 : i64, scratch_operands = 0 : i64, tpu.core_type = #tpu.core_type<tc>, window_params = [{transform_indices = @transform_0, window_bounds = array<i64: 8, 128>}, {transform_indices = @transform_1, window_bounds = array<i64: 8, 128>}, {transform_indices = @transform_2, window_bounds = array<i64: 8, 128>}, {transform_indices = @transform_3, window_bounds = array<i64: 8, 128>}, {transform_indices = @transform_4, window_bounds = array<i64: 8, 128>}, {transform_indices = @transform_5, window_bounds = array<i64: 8, 128>}]} {
    %c0 = arith.constant 0 : index
    %c0_0 = arith.constant 0 : index
    %0 = vector.load %arg1[%c0, %c0_0] : memref<8x128xf32, #tpu.memory_space<vmem>>, vector<8x128xf32>
    %c0_1 = arith.constant 0 : index
    %c0_2 = arith.constant 0 : index
    %1 = vector.load %arg2[%c0_1, %c0_2] : memref<8x128xf32, #tpu.memory_space<vmem>>, vector<8x128xf32>
    %c0_3 = arith.constant 0 : index
    %c0_4 = arith.constant 0 : index
    %2 = vector.load %arg3[%c0_3, %c0_4] : memref<8x128xf32, #tpu.memory_space<vmem>>, vector<8x128xf32>
    %c0_5 = arith.constant 0 : index
    %c0_6 = arith.constant 0 : index
    %3 = vector.load %arg4[%c0_5, %c0_6] : memref<8x128xf32, #tpu.memory_space<vmem>>, vector<8x128xf32>
    %c0_7 = arith.constant 0 : index
    %c0_8 = arith.constant 0 : index
    %4 = vector.load %arg5[%c0_7, %c0_8] : memref<8x128xf32, #tpu.memory_space<vmem>>, vector<8x128xf32>
    %5 = vector.extract_strided_slice %1 {offsets = [0, 0], sizes = [1, 128], strides = [1, 1]} : vector<8x128xf32> to vector<1x128xf32>
    %6 = vector.extract_strided_slice %1 {offsets = [2, 0], sizes = [1, 128], strides = [1, 1]} : vector<8x128xf32> to vector<1x128xf32>
    %7 = arith.addf %5, %6 : vector<1x128xf32>
    %cst = arith.constant 5.000000e-01 : f32
    %8 = vector.broadcast %cst : f32 to vector<1x128xf32>
    %9 = arith.mulf %7, %8 : vector<1x128xf32>
    %10 = vector.extract_strided_slice %1 {offsets = [1, 0], sizes = [1, 128], strides = [1, 1]} : vector<8x128xf32> to vector<1x128xf32>
    %11 = vector.extract_strided_slice %1 {offsets = [3, 0], sizes = [1, 128], strides = [1, 1]} : vector<8x128xf32> to vector<1x128xf32>
    %12 = arith.addf %10, %11 : vector<1x128xf32>
    %cst_9 = arith.constant 5.000000e-01 : f32
    %13 = vector.broadcast %cst_9 : f32 to vector<1x128xf32>
    %14 = arith.mulf %12, %13 : vector<1x128xf32>
    %15 = vector.extract_strided_slice %1 {offsets = [2, 0], sizes = [1, 128], strides = [1, 1]} : vector<8x128xf32> to vector<1x128xf32>
    %16 = vector.extract_strided_slice %1 {offsets = [0, 0], sizes = [1, 128], strides = [1, 1]} : vector<8x128xf32> to vector<1x128xf32>
    %17 = arith.subf %15, %16 : vector<1x128xf32>
    %cst_10 = arith.constant 1.000000e+00 : f32
    %18 = vector.broadcast %cst_10 : f32 to vector<1x128xf32>
    %19 = arith.addf %17, %18 : vector<1x128xf32>
    %20 = vector.extract_strided_slice %1 {offsets = [3, 0], sizes = [1, 128], strides = [1, 1]} : vector<8x128xf32> to vector<1x128xf32>
    %21 = vector.extract_strided_slice %1 {offsets = [1, 0], sizes = [1, 128], strides = [1, 1]} : vector<8x128xf32> to vector<1x128xf32>
    %22 = arith.subf %20, %21 : vector<1x128xf32>
    %cst_11 = arith.constant 1.000000e+00 : f32
    %23 = vector.broadcast %cst_11 : f32 to vector<1x128xf32>
    %24 = arith.addf %22, %23 : vector<1x128xf32>
    %25 = vector.extract_strided_slice %2 {offsets = [0, 0], sizes = [1, 128], strides = [1, 1]} : vector<8x128xf32> to vector<1x128xf32>
    %26 = vector.extract_strided_slice %2 {offsets = [2, 0], sizes = [1, 128], strides = [1, 1]} : vector<8x128xf32> to vector<1x128xf32>
    %27 = arith.addf %25, %26 : vector<1x128xf32>
    %cst_12 = arith.constant 5.000000e-01 : f32
    %28 = vector.broadcast %cst_12 : f32 to vector<1x128xf32>
    %29 = arith.mulf %27, %28 : vector<1x128xf32>
    %30 = vector.extract_strided_slice %2 {offsets = [1, 0], sizes = [1, 128], strides = [1, 1]} : vector<8x128xf32> to vector<1x128xf32>
    %31 = vector.extract_strided_slice %2 {offsets = [3, 0], sizes = [1, 128], strides = [1, 1]} : vector<8x128xf32> to vector<1x128xf32>
    %32 = arith.addf %30, %31 : vector<1x128xf32>
    %cst_13 = arith.constant 5.000000e-01 : f32
    %33 = vector.broadcast %cst_13 : f32 to vector<1x128xf32>
    %34 = arith.mulf %32, %33 : vector<1x128xf32>
    %35 = vector.extract_strided_slice %2 {offsets = [2, 0], sizes = [1, 128], strides = [1, 1]} : vector<8x128xf32> to vector<1x128xf32>
    %36 = vector.extract_strided_slice %2 {offsets = [0, 0], sizes = [1, 128], strides = [1, 1]} : vector<8x128xf32> to vector<1x128xf32>
    %37 = arith.subf %35, %36 : vector<1x128xf32>
    %cst_14 = arith.constant 1.000000e+00 : f32
    %38 = vector.broadcast %cst_14 : f32 to vector<1x128xf32>
    %39 = arith.addf %37, %38 : vector<1x128xf32>
    %40 = vector.extract_strided_slice %2 {offsets = [3, 0], sizes = [1, 128], strides = [1, 1]} : vector<8x128xf32> to vector<1x128xf32>
    %41 = vector.extract_strided_slice %2 {offsets = [1, 0], sizes = [1, 128], strides = [1, 1]} : vector<8x128xf32> to vector<1x128xf32>
    %42 = arith.subf %40, %41 : vector<1x128xf32>
    %cst_15 = arith.constant 1.000000e+00 : f32
    %43 = vector.broadcast %cst_15 : f32 to vector<1x128xf32>
    %44 = arith.addf %42, %43 : vector<1x128xf32>
    %45 = arith.subf %29, %9 : vector<1x128xf32>
    %46 = arith.divf %45, %19 : vector<1x128xf32>
    %47 = arith.subf %34, %14 : vector<1x128xf32>
    %48 = arith.divf %47, %24 : vector<1x128xf32>
    %49 = arith.divf %39, %19 : vector<1x128xf32>
    %50 = arith.divf %44, %24 : vector<1x128xf32>
    %51 = vector.extract_strided_slice %0 {offsets = [0, 0], sizes = [1, 128], strides = [1, 1]} : vector<8x128xf32> to vector<1x128xf32>
    %52 = vector.extract_strided_slice %0 {offsets = [1, 0], sizes = [1, 128], strides = [1, 1]} : vector<8x128xf32> to vector<1x128xf32>
    %53 = vector.extract_strided_slice %0 {offsets = [2, 0], sizes = [1, 128], strides = [1, 1]} : vector<8x128xf32> to vector<1x128xf32>
    %54 = math.exp %53 : vector<1x128xf32>
    %55 = vector.extract_strided_slice %0 {offsets = [3, 0], sizes = [1, 128], strides = [1, 1]} : vector<8x128xf32> to vector<1x128xf32>
    %56 = math.exp %55 : vector<1x128xf32>
    %cst_16 = arith.constant 0.000000e+00 : f32
    %57 = vector.broadcast %cst_16 : f32 to vector<1x128xf32>
    %58 = arith.cmpf ole, %54, %57 : vector<1x128xf32>
    %cst_17 = arith.constant 1.000000e+10 : f32
    %59 = vector.broadcast %cst_17 : f32 to vector<1x128xf32>
    %60 = arith.minimumf %54, %59 : vector<1x128xf32>
    %cst_18 = arith.constant 9.99999997E-7 : f32
    %61 = vector.broadcast %cst_18 : f32 to vector<1x128xf32>
    %62 = arith.select %58, %61, %60 : vector<1x128xi1>, vector<1x128xf32>
    %cst_19 = arith.constant 0.000000e+00 : f32
    %63 = vector.broadcast %cst_19 : f32 to vector<1x128xf32>
    %64 = arith.cmpf ole, %56, %63 : vector<1x128xf32>
    %cst_20 = arith.constant 1.000000e+10 : f32
    %65 = vector.broadcast %cst_20 : f32 to vector<1x128xf32>
    %66 = arith.minimumf %56, %65 : vector<1x128xf32>
    %cst_21 = arith.constant 9.99999997E-7 : f32
    %67 = vector.broadcast %cst_21 : f32 to vector<1x128xf32>
    %68 = arith.select %64, %67, %66 : vector<1x128xi1>, vector<1x128xf32>
    %69 = vector.extract_strided_slice %1 {offsets = [0, 0], sizes = [1, 128], strides = [1, 1]} : vector<8x128xf32> to vector<1x128xf32>
    %70 = vector.extract_strided_slice %1 {offsets = [2, 0], sizes = [1, 128], strides = [1, 1]} : vector<8x128xf32> to vector<1x128xf32>
    %71 = vector.extract_strided_slice %4 {offsets = [0, 0], sizes = [1, 128], strides = [1, 1]} : vector<8x128xf32> to vector<1x128xf32>
    %72 = arith.addf %69, %70 : vector<1x128xf32>
    %cst_22 = arith.constant 5.000000e-01 : f32
    %73 = vector.broadcast %cst_22 : f32 to vector<1x128xf32>
    %74 = arith.mulf %73, %72 : vector<1x128xf32>
    %cst_23 = arith.constant 5.000000e-01 : f32
    %75 = vector.broadcast %cst_23 : f32 to vector<1x128xf32>
    %76 = arith.addf %74, %75 : vector<1x128xf32>
    %77 = arith.subf %70, %69 : vector<1x128xf32>
    %cst_24 = arith.constant 1.000000e+00 : f32
    %78 = vector.broadcast %cst_24 : f32 to vector<1x128xf32>
    %79 = arith.addf %77, %78 : vector<1x128xf32>
    %cst_25 = arith.constant 5.000000e-01 : f32
    %80 = vector.broadcast %cst_25 : f32 to vector<1x128xf32>
    %81 = arith.mulf %80, %49 : vector<1x128xf32>
    %82 = arith.subf %46, %81 : vector<1x128xf32>
    %83 = arith.subf %71, %76 : vector<1x128xf32>
    %84 = arith.divf %83, %79 : vector<1x128xf32>
    %85 = arith.subf %51, %82 : vector<1x128xf32>
    %cst_26 = arith.constant 2.000000e+00 : f32
    %86 = vector.broadcast %cst_26 : f32 to vector<1x128xf32>
    %87 = arith.mulf %86, %85 : vector<1x128xf32>
    %cst_27 = arith.constant 0.000000e+00 : f32
    %88 = vector.broadcast %cst_27 : f32 to vector<1x128xf32>
    %89 = arith.subf %88, %76 : vector<1x128xf32>
    %90 = arith.divf %89, %79 : vector<1x128xf32>
    %cst_28 = arith.constant 5.000000e-01 : f32
    %91 = vector.broadcast %cst_28 : f32 to vector<1x128xf32>
    %92 = arith.mulf %91, %49 : vector<1x128xf32>
    %93 = arith.addf %46, %92 : vector<1x128xf32>
    %94 = arith.subf %93, %51 : vector<1x128xf32>
    %cst_29 = arith.constant 2.000000e+00 : f32
    %95 = vector.broadcast %cst_29 : f32 to vector<1x128xf32>
    %96 = arith.mulf %95, %94 : vector<1x128xf32>
    %97 = arith.subf %51, %90 : vector<1x128xf32>
    %cst_30 = arith.constant 2.000000e+00 : f32
    %98 = vector.broadcast %cst_30 : f32 to vector<1x128xf32>
    %99 = arith.mulf %98, %97 : vector<1x128xf32>
    %100 = arith.subf %84, %51 : vector<1x128xf32>
    %cst_31 = arith.constant 2.000000e+00 : f32
    %101 = vector.broadcast %cst_31 : f32 to vector<1x128xf32>
    %102 = arith.mulf %101, %100 : vector<1x128xf32>
    %103 = vector.extract_strided_slice %1 {offsets = [1, 0], sizes = [1, 128], strides = [1, 1]} : vector<8x128xf32> to vector<1x128xf32>
    %104 = vector.extract_strided_slice %1 {offsets = [3, 0], sizes = [1, 128], strides = [1, 1]} : vector<8x128xf32> to vector<1x128xf32>
    %105 = vector.extract_strided_slice %4 {offsets = [1, 0], sizes = [1, 128], strides = [1, 1]} : vector<8x128xf32> to vector<1x128xf32>
    %106 = arith.addf %103, %104 : vector<1x128xf32>
    %cst_32 = arith.constant 5.000000e-01 : f32
    %107 = vector.broadcast %cst_32 : f32 to vector<1x128xf32>
    %108 = arith.mulf %107, %106 : vector<1x128xf32>
    %cst_33 = arith.constant 5.000000e-01 : f32
    %109 = vector.broadcast %cst_33 : f32 to vector<1x128xf32>
    %110 = arith.addf %108, %109 : vector<1x128xf32>
    %111 = arith.subf %104, %103 : vector<1x128xf32>
    %cst_34 = arith.constant 1.000000e+00 : f32
    %112 = vector.broadcast %cst_34 : f32 to vector<1x128xf32>
    %113 = arith.addf %111, %112 : vector<1x128xf32>
    %cst_35 = arith.constant 5.000000e-01 : f32
    %114 = vector.broadcast %cst_35 : f32 to vector<1x128xf32>
    %115 = arith.mulf %114, %50 : vector<1x128xf32>
    %116 = arith.subf %48, %115 : vector<1x128xf32>
    %117 = arith.subf %105, %110 : vector<1x128xf32>
    %118 = arith.divf %117, %113 : vector<1x128xf32>
    %119 = arith.subf %52, %116 : vector<1x128xf32>
    %cst_36 = arith.constant 2.000000e+00 : f32
    %120 = vector.broadcast %cst_36 : f32 to vector<1x128xf32>
    %121 = arith.mulf %120, %119 : vector<1x128xf32>
    %cst_37 = arith.constant 0.000000e+00 : f32
    %122 = vector.broadcast %cst_37 : f32 to vector<1x128xf32>
    %123 = arith.subf %122, %110 : vector<1x128xf32>
    %124 = arith.divf %123, %113 : vector<1x128xf32>
    %cst_38 = arith.constant 5.000000e-01 : f32
    %125 = vector.broadcast %cst_38 : f32 to vector<1x128xf32>
    %126 = arith.mulf %125, %50 : vector<1x128xf32>
    %127 = arith.addf %48, %126 : vector<1x128xf32>
    %128 = arith.subf %127, %52 : vector<1x128xf32>
    %cst_39 = arith.constant 2.000000e+00 : f32
    %129 = vector.broadcast %cst_39 : f32 to vector<1x128xf32>
    %130 = arith.mulf %129, %128 : vector<1x128xf32>
    %131 = arith.subf %52, %124 : vector<1x128xf32>
    %cst_40 = arith.constant 2.000000e+00 : f32
    %132 = vector.broadcast %cst_40 : f32 to vector<1x128xf32>
    %133 = arith.mulf %132, %131 : vector<1x128xf32>
    %134 = arith.subf %118, %52 : vector<1x128xf32>
    %cst_41 = arith.constant 2.000000e+00 : f32
    %135 = vector.broadcast %cst_41 : f32 to vector<1x128xf32>
    %136 = arith.mulf %135, %134 : vector<1x128xf32>
    %137 = tpu.concatenate %62, %62, %62, %62, %68, %68, %68, %68 in 0 : vector<1x128xf32>, vector<1x128xf32>, vector<1x128xf32>, vector<1x128xf32>, vector<1x128xf32>, vector<1x128xf32>, vector<1x128xf32>, vector<1x128xf32> -> vector<8x128xf32>
    %138 = tpu.concatenate %87, %96, %99, %102, %121, %130, %133, %136 in 0 : vector<1x128xf32>, vector<1x128xf32>, vector<1x128xf32>, vector<1x128xf32>, vector<1x128xf32>, vector<1x128xf32>, vector<1x128xf32>, vector<1x128xf32> -> vector<8x128xf32>
    %139 = tpu.concatenate %82, %90, %90, %90, %116, %124, %124, %124 in 0 : vector<1x128xf32>, vector<1x128xf32>, vector<1x128xf32>, vector<1x128xf32>, vector<1x128xf32>, vector<1x128xf32>, vector<1x128xf32>, vector<1x128xf32> -> vector<8x128xf32>
    %140 = tpu.concatenate %84, %93, %84, %84, %118, %127, %118, %118 in 0 : vector<1x128xf32>, vector<1x128xf32>, vector<1x128xf32>, vector<1x128xf32>, vector<1x128xf32>, vector<1x128xf32>, vector<1x128xf32>, vector<1x128xf32> -> vector<8x128xf32>
    %141 = arith.subf %140, %139 : vector<8x128xf32>
    %142 = arith.maximumf %141, %138 : vector<8x128xf32>
    %143 = arith.cmpf olt, %142, %137 : vector<8x128xf32>
    %144 = arith.maximumf %141, %137 : vector<8x128xf32>
    %145 = arith.cmpf olt, %144, %138 : vector<8x128xf32>
    %146 = arith.maximumf %141, %138 : vector<8x128xf32>
    %147 = arith.maximumf %141, %137 : vector<8x128xf32>
    %cst_42 = arith.constant 2.71828175 : f32
    %148 = vector.broadcast %cst_42 : f32 to vector<8x128xf32>
    %149 = arith.mulf %148, %137 : vector<8x128xf32>
    %150 = arith.minimumf %149, %138 : vector<8x128xf32>
    %cst_43 = arith.constant 2.000000e+00 : f32
    %151 = vector.broadcast %cst_43 : f32 to vector<8x128xf32>
    %152 = arith.maximumf %141, %151 : vector<8x128xf32>
    %cst_44 = arith.constant 2.000000e+00 : f32
    %153 = vector.broadcast %cst_44 : f32 to vector<8x128xf32>
    %154 = arith.subf %138, %153 : vector<8x128xf32>
    %cst_45 = arith.constant 2.71828175 : f32
    %155 = vector.broadcast %cst_45 : f32 to vector<8x128xf32>
    %156 = arith.mulf %155, %137 : vector<8x128xf32>
    %157 = arith.maximumf %154, %156 : vector<8x128xf32>
    %158 = arith.maximumf %152, %157 : vector<8x128xf32>
    %cst_46 = arith.constant 2.000000e+00 : f32
    %159 = vector.broadcast %cst_46 : f32 to vector<8x128xf32>
    %160 = arith.subf %138, %159 : vector<8x128xf32>
    %161 = arith.maximumf %141, %160 : vector<8x128xf32>
    %cst_47 = arith.constant 2.71828175 : f32
    %162 = vector.broadcast %cst_47 : f32 to vector<8x128xf32>
    %163 = arith.mulf %162, %137 : vector<8x128xf32>
    %164 = arith.maximumf %161, %163 : vector<8x128xf32>
    %cst_48 = arith.constant 2.71828175 : f32
    %165 = vector.broadcast %cst_48 : f32 to vector<8x128xf32>
    %166 = arith.minimumf %165, %138 : vector<8x128xf32>
    %167 = arith.mulf %138, %138 : vector<8x128xf32>
    %cst_49 = arith.constant 3.200000e+01 : f32
    %168 = vector.broadcast %cst_49 : f32 to vector<8x128xf32>
    %169 = arith.divf %168, %167 : vector<8x128xf32>
    %cst_50 = arith.constant 1.000000e+00 : f32
    %170 = vector.broadcast %cst_50 : f32 to vector<8x128xf32>
    %171 = arith.subf %170, %169 : vector<8x128xf32>
    %cst_51 = arith.constant 0.000000e+00 : f32
    %172 = vector.broadcast %cst_51 : f32 to vector<8x128xf32>
    %173 = arith.maximumf %171, %172 : vector<8x128xf32>
    %174 = math.sqrt %173 : vector<8x128xf32>
    %cst_52 = arith.constant 2.71828175 : f32
    %175 = vector.broadcast %cst_52 : f32 to vector<8x128xf32>
    %176 = arith.mulf %175, %137 : vector<8x128xf32>
    %177 = arith.minimumf %176, %138 : vector<8x128xf32>
    %cst_53 = arith.constant 2.500000e-01 : f32
    %178 = vector.broadcast %cst_53 : f32 to vector<8x128xf32>
    %179 = arith.mulf %178, %138 : vector<8x128xf32>
    %cst_54 = arith.constant 1.000000e+00 : f32
    %180 = vector.broadcast %cst_54 : f32 to vector<8x128xf32>
    %181 = arith.addf %180, %174 : vector<8x128xf32>
    %182 = arith.mulf %179, %181 : vector<8x128xf32>
    %183 = arith.minimumf %177, %182 : vector<8x128xf32>
    %cst_55 = arith.constant 2.500000e-01 : f32
    %184 = vector.broadcast %cst_55 : f32 to vector<8x128xf32>
    %185 = arith.mulf %184, %138 : vector<8x128xf32>
    %cst_56 = arith.constant 1.000000e+00 : f32
    %186 = vector.broadcast %cst_56 : f32 to vector<8x128xf32>
    %187 = arith.subf %186, %174 : vector<8x128xf32>
    %188 = arith.mulf %185, %187 : vector<8x128xf32>
    %189 = arith.maximumf %164, %188 : vector<8x128xf32>
    %cst_57 = arith.constant 2.71828175 : f32
    %190 = vector.broadcast %cst_57 : f32 to vector<8x128xf32>
    %191 = arith.mulf %190, %137 : vector<8x128xf32>
    %192 = arith.minimumf %191, %138 : vector<8x128xf32>
    %193 = tpu.concatenate %146, %147, %158, %164, %164, %189 in 0 : vector<8x128xf32>, vector<8x128xf32>, vector<8x128xf32>, vector<8x128xf32>, vector<8x128xf32>, vector<8x128xf32> -> vector<48x128xf32>
    %194 = tpu.concatenate %137, %150, %138, %166, %183, %192 in 0 : vector<8x128xf32>, vector<8x128xf32>, vector<8x128xf32>, vector<8x128xf32>, vector<8x128xf32>, vector<8x128xf32> -> vector<48x128xf32>
    %195 = tpu.concatenate %137, %137, %137, %137, %137, %137 in 0 : vector<8x128xf32>, vector<8x128xf32>, vector<8x128xf32>, vector<8x128xf32>, vector<8x128xf32>, vector<8x128xf32> -> vector<48x128xf32>
    %196 = tpu.concatenate %138, %138, %138, %138, %138, %138 in 0 : vector<8x128xf32>, vector<8x128xf32>, vector<8x128xf32>, vector<8x128xf32>, vector<8x128xf32>, vector<8x128xf32> -> vector<48x128xf32>
    %197 = tpu.iota {dimensions = array<i32: 0>} : vector<48x128xi32>
    %c24_i32 = arith.constant 24 : i32
    %198 = vector.broadcast %c24_i32 : i32 to vector<48x128xi32>
    %199 = arith.cmpi sge, %197, %198 : vector<48x128xi32>
    %200 = math.log %195 : vector<48x128xf32>
    %201 = arith.subf %193, %196 : vector<48x128xf32>
    %cst_58 = arith.constant 5.000000e-01 : f32
    %202 = vector.broadcast %cst_58 : f32 to vector<48x128xf32>
    %203 = arith.mulf %201, %202 : vector<48x128xf32>
    %cst_59 = arith.constant -1.000000e+00 : f32
    %cst_60 = arith.constant 1.000000e+00 : f32
    %204 = vector.broadcast %cst_59 : f32 to vector<48x128xf32>
    %205 = arith.maximumf %204, %203 : vector<48x128xf32>
    %206 = vector.broadcast %cst_60 : f32 to vector<48x128xf32>
    %207 = arith.minimumf %206, %205 : vector<48x128xf32>
    %cst_61 = arith.constant 5.000000e-01 : f32
    %208 = vector.broadcast %cst_61 : f32 to vector<48x128xf32>
    %209 = arith.mulf %208, %207 : vector<48x128xf32>
    %210 = math.log %193 : vector<48x128xf32>
    %211 = arith.subf %210, %200 : vector<48x128xf32>
    %cst_62 = arith.constant 1.000000e+00 : f32
    %212 = vector.broadcast %cst_62 : f32 to vector<48x128xf32>
    %213 = arith.mulf %211, %212 : vector<48x128xf32>
    %cst_63 = arith.constant -1.000000e+00 : f32
    %cst_64 = arith.constant 1.000000e+00 : f32
    %214 = vector.broadcast %cst_63 : f32 to vector<48x128xf32>
    %215 = arith.maximumf %214, %213 : vector<48x128xf32>
    %216 = vector.broadcast %cst_64 : f32 to vector<48x128xf32>
    %217 = arith.minimumf %216, %215 : vector<48x128xf32>
    %218 = tpu.reciprocal %193 {approx = true} : vector<48x128xf32> -> vector<48x128xf32>
    %219 = arith.mulf %217, %218 : vector<48x128xf32>
    %220 = arith.addf %209, %219 : vector<48x128xf32>
    %221 = arith.mulf %193, %220 : vector<48x128xf32>
    %222 = arith.select %199, %221, %220 : vector<48x128xi1>, vector<48x128xf32>
    %223 = arith.subf %194, %196 : vector<48x128xf32>
    %cst_65 = arith.constant 5.000000e-01 : f32
    %224 = vector.broadcast %cst_65 : f32 to vector<48x128xf32>
    %225 = arith.mulf %223, %224 : vector<48x128xf32>
    %cst_66 = arith.constant -1.000000e+00 : f32
    %cst_67 = arith.constant 1.000000e+00 : f32
    %226 = vector.broadcast %cst_66 : f32 to vector<48x128xf32>
    %227 = arith.maximumf %226, %225 : vector<48x128xf32>
    %228 = vector.broadcast %cst_67 : f32 to vector<48x128xf32>
    %229 = arith.minimumf %228, %227 : vector<48x128xf32>
    %cst_68 = arith.constant 5.000000e-01 : f32
    %230 = vector.broadcast %cst_68 : f32 to vector<48x128xf32>
    %231 = arith.mulf %230, %229 : vector<48x128xf32>
    %232 = math.log %194 : vector<48x128xf32>
    %233 = arith.subf %232, %200 : vector<48x128xf32>
    %cst_69 = arith.constant 1.000000e+00 : f32
    %234 = vector.broadcast %cst_69 : f32 to vector<48x128xf32>
    %235 = arith.mulf %233, %234 : vector<48x128xf32>
    %cst_70 = arith.constant -1.000000e+00 : f32
    %cst_71 = arith.constant 1.000000e+00 : f32
    %236 = vector.broadcast %cst_70 : f32 to vector<48x128xf32>
    %237 = arith.maximumf %236, %235 : vector<48x128xf32>
    %238 = vector.broadcast %cst_71 : f32 to vector<48x128xf32>
    %239 = arith.minimumf %238, %237 : vector<48x128xf32>
    %240 = tpu.reciprocal %194 {approx = true} : vector<48x128xf32> -> vector<48x128xf32>
    %241 = arith.mulf %239, %240 : vector<48x128xf32>
    %242 = arith.addf %231, %241 : vector<48x128xf32>
    %243 = arith.mulf %194, %242 : vector<48x128xf32>
    %244 = arith.select %199, %243, %242 : vector<48x128xi1>, vector<48x128xf32>
    %cst_72 = arith.constant 0.000000e+00 : f32
    %245 = vector.broadcast %cst_72 : f32 to vector<48x128xf32>
    %246 = arith.cmpf oge, %222, %245 : vector<48x128xf32>
    %cst_73 = arith.constant dense<true> : vector<48x128xi1>
    %247 = arith.xori %246, %cst_73 : vector<48x128xi1>
    %cst_74 = arith.constant 0.000000e+00 : f32
    %248 = vector.broadcast %cst_74 : f32 to vector<48x128xf32>
    %249 = arith.cmpf ole, %244, %248 : vector<48x128xf32>
    %250 = arith.andi %247, %249 : vector<48x128xi1>
    %251 = arith.ori %246, %250 : vector<48x128xi1>
    %252 = arith.select %246, %193, %194 : vector<48x128xi1>, vector<48x128xf32>
    %253 = arith.select %251, %252, %193 : vector<48x128xi1>, vector<48x128xf32>
    %254 = arith.select %251, %252, %194 : vector<48x128xi1>, vector<48x128xf32>
    %c0_i32 = arith.constant 0 : i32
    %c40_i32 = arith.constant 40 : i32
    %255 = arith.addi %c0_i32, %c40_i32 : i32
    %c1_i32 = arith.constant 1 : i32
    %256:2 = scf.for %arg7 = %c0_i32 to %255 step %c1_i32 iter_args(%arg8 = %253, %arg9 = %254) -> (vector<48x128xf32>, vector<48x128xf32>)  : i32 {
      %478 = arith.subf %arg9, %arg8 : vector<48x128xf32>
      %cst_120 = arith.constant 1.000000e-01 : f32
      %479 = vector.broadcast %cst_120 : f32 to vector<48x128xf32>
      %480 = arith.cmpf olt, %478, %479 : vector<48x128xf32>
      %481 = arith.addf %arg8, %arg9 : vector<48x128xf32>
      %cst_121 = arith.constant 5.000000e-01 : f32
      %482 = vector.broadcast %cst_121 : f32 to vector<48x128xf32>
      %483 = arith.mulf %481, %482 : vector<48x128xf32>
      %484 = arith.subf %483, %196 : vector<48x128xf32>
      %cst_122 = arith.constant 5.000000e-01 : f32
      %485 = vector.broadcast %cst_122 : f32 to vector<48x128xf32>
      %486 = arith.mulf %484, %485 : vector<48x128xf32>
      %cst_123 = arith.constant -1.000000e+00 : f32
      %cst_124 = arith.constant 1.000000e+00 : f32
      %487 = vector.broadcast %cst_123 : f32 to vector<48x128xf32>
      %488 = arith.maximumf %487, %486 : vector<48x128xf32>
      %489 = vector.broadcast %cst_124 : f32 to vector<48x128xf32>
      %490 = arith.minimumf %489, %488 : vector<48x128xf32>
      %cst_125 = arith.constant 5.000000e-01 : f32
      %491 = vector.broadcast %cst_125 : f32 to vector<48x128xf32>
      %492 = arith.mulf %491, %490 : vector<48x128xf32>
      %493 = math.log %483 : vector<48x128xf32>
      %494 = arith.subf %493, %200 : vector<48x128xf32>
      %cst_126 = arith.constant 1.000000e+00 : f32
      %495 = vector.broadcast %cst_126 : f32 to vector<48x128xf32>
      %496 = arith.mulf %494, %495 : vector<48x128xf32>
      %cst_127 = arith.constant -1.000000e+00 : f32
      %cst_128 = arith.constant 1.000000e+00 : f32
      %497 = vector.broadcast %cst_127 : f32 to vector<48x128xf32>
      %498 = arith.maximumf %497, %496 : vector<48x128xf32>
      %499 = vector.broadcast %cst_128 : f32 to vector<48x128xf32>
      %500 = arith.minimumf %499, %498 : vector<48x128xf32>
      %501 = tpu.reciprocal %483 {approx = true} : vector<48x128xf32> -> vector<48x128xf32>
      %502 = arith.mulf %500, %501 : vector<48x128xf32>
      %503 = arith.addf %492, %502 : vector<48x128xf32>
      %504 = arith.mulf %483, %503 : vector<48x128xf32>
      %505 = arith.select %199, %504, %503 : vector<48x128xi1>, vector<48x128xf32>
      %cst_129 = arith.constant 0.000000e+00 : f32
      %506 = vector.broadcast %cst_129 : f32 to vector<48x128xf32>
      %507 = arith.cmpf oge, %505, %506 : vector<48x128xf32>
      %508 = arith.select %507, %arg8, %483 : vector<48x128xi1>, vector<48x128xf32>
      %509 = arith.select %507, %483, %arg9 : vector<48x128xi1>, vector<48x128xf32>
      %510 = arith.select %480, %arg8, %508 : vector<48x128xi1>, vector<48x128xf32>
      %511 = arith.select %480, %arg9, %509 : vector<48x128xi1>, vector<48x128xf32>
      scf.yield %510, %511 : vector<48x128xf32>, vector<48x128xf32>
    }
    %257 = arith.addf %256#0, %256#1 : vector<48x128xf32>
    %cst_75 = arith.constant 5.000000e-01 : f32
    %258 = vector.broadcast %cst_75 : f32 to vector<48x128xf32>
    %259 = arith.mulf %257, %258 : vector<48x128xf32>
    %260 = vector.extract_strided_slice %259 {offsets = [0, 0], sizes = [8, 128], strides = [1, 1]} : vector<48x128xf32> to vector<8x128xf32>
    %261 = vector.extract_strided_slice %259 {offsets = [8, 0], sizes = [8, 128], strides = [1, 1]} : vector<48x128xf32> to vector<8x128xf32>
    %262 = vector.extract_strided_slice %259 {offsets = [16, 0], sizes = [8, 128], strides = [1, 1]} : vector<48x128xf32> to vector<8x128xf32>
    %263 = vector.extract_strided_slice %259 {offsets = [24, 0], sizes = [8, 128], strides = [1, 1]} : vector<48x128xf32> to vector<8x128xf32>
    %264 = vector.extract_strided_slice %259 {offsets = [32, 0], sizes = [8, 128], strides = [1, 1]} : vector<48x128xf32> to vector<8x128xf32>
    %265 = vector.extract_strided_slice %259 {offsets = [40, 0], sizes = [8, 128], strides = [1, 1]} : vector<48x128xf32> to vector<8x128xf32>
    %266 = tpu.concatenate %141, %138, %261, %262, %263, %264, %265 in 0 : vector<8x128xf32>, vector<8x128xf32>, vector<8x128xf32>, vector<8x128xf32>, vector<8x128xf32>, vector<8x128xf32>, vector<8x128xf32> -> vector<56x128xf32>
    %267 = math.log %137 : vector<8x128xf32>
    %268 = tpu.concatenate %267, %267, %267, %267, %267, %267, %267 in 0 : vector<8x128xf32>, vector<8x128xf32>, vector<8x128xf32>, vector<8x128xf32>, vector<8x128xf32>, vector<8x128xf32>, vector<8x128xf32> -> vector<56x128xf32>
    %269 = tpu.concatenate %138, %138, %138, %138, %138, %138, %138 in 0 : vector<8x128xf32>, vector<8x128xf32>, vector<8x128xf32>, vector<8x128xf32>, vector<8x128xf32>, vector<8x128xf32>, vector<8x128xf32> -> vector<56x128xf32>
    %270 = arith.subf %266, %269 : vector<56x128xf32>
    %cst_76 = arith.constant 5.000000e-01 : f32
    %271 = vector.broadcast %cst_76 : f32 to vector<56x128xf32>
    %272 = arith.mulf %270, %271 : vector<56x128xf32>
    %273 = math.absf %272 : vector<56x128xf32>
    %cst_77 = arith.constant 1.000000e+00 : f32
    %274 = vector.broadcast %cst_77 : f32 to vector<56x128xf32>
    %275 = arith.cmpf olt, %273, %274 : vector<56x128xf32>
    %cst_78 = arith.constant 5.000000e-01 : f32
    %276 = vector.broadcast %cst_78 : f32 to vector<56x128xf32>
    %277 = arith.mulf %276, %273 : vector<56x128xf32>
    %278 = arith.mulf %277, %273 : vector<56x128xf32>
    %cst_79 = arith.constant 5.000000e-01 : f32
    %279 = vector.broadcast %cst_79 : f32 to vector<56x128xf32>
    %280 = arith.subf %273, %279 : vector<56x128xf32>
    %281 = arith.select %275, %278, %280 : vector<56x128xi1>, vector<56x128xf32>
    %282 = math.log %266 : vector<56x128xf32>
    %283 = arith.subf %282, %268 : vector<56x128xf32>
    %284 = math.absf %283 : vector<56x128xf32>
    %cst_80 = arith.constant 1.000000e+00 : f32
    %285 = vector.broadcast %cst_80 : f32 to vector<56x128xf32>
    %286 = arith.cmpf olt, %284, %285 : vector<56x128xf32>
    %cst_81 = arith.constant 5.000000e-01 : f32
    %287 = vector.broadcast %cst_81 : f32 to vector<56x128xf32>
    %288 = arith.mulf %287, %284 : vector<56x128xf32>
    %289 = arith.mulf %288, %284 : vector<56x128xf32>
    %cst_82 = arith.constant 5.000000e-01 : f32
    %290 = vector.broadcast %cst_82 : f32 to vector<56x128xf32>
    %291 = arith.subf %284, %290 : vector<56x128xf32>
    %292 = arith.select %286, %289, %291 : vector<56x128xi1>, vector<56x128xf32>
    %293 = arith.addf %281, %292 : vector<56x128xf32>
    %cst_83 = arith.constant 5.65685415 : f32
    %294 = vector.broadcast %cst_83 : f32 to vector<8x128xf32>
    %295 = arith.cmpf ole, %138, %294 : vector<8x128xf32>
    %cst_84 = arith.constant dense<true> : vector<8x128xi1>
    %296 = arith.xori %295, %cst_84 : vector<8x128xi1>
    %true = arith.constant true
    %297 = vector.broadcast %true : i1 to vector<8x128xi1>
    %298 = vector.extract_strided_slice %266 {offsets = [0, 0], sizes = [8, 128], strides = [1, 1]} : vector<56x128xf32> to vector<8x128xf32>
    %299 = vector.extract_strided_slice %293 {offsets = [0, 0], sizes = [8, 128], strides = [1, 1]} : vector<56x128xf32> to vector<8x128xf32>
    %300 = vector.extract_strided_slice %266 {offsets = [8, 0], sizes = [8, 128], strides = [1, 1]} : vector<56x128xf32> to vector<8x128xf32>
    %301 = vector.extract_strided_slice %293 {offsets = [8, 0], sizes = [8, 128], strides = [1, 1]} : vector<56x128xf32> to vector<8x128xf32>
    %302 = arith.cmpf olt, %301, %299 : vector<8x128xf32>
    %303 = arith.andi %297, %302 : vector<8x128xi1>
    %304 = arith.select %303, %300, %298 : vector<8x128xi1>, vector<8x128xf32>
    %305 = arith.select %303, %301, %299 : vector<8x128xi1>, vector<8x128xf32>
    %306 = vector.extract_strided_slice %266 {offsets = [16, 0], sizes = [8, 128], strides = [1, 1]} : vector<56x128xf32> to vector<8x128xf32>
    %307 = vector.extract_strided_slice %293 {offsets = [16, 0], sizes = [8, 128], strides = [1, 1]} : vector<56x128xf32> to vector<8x128xf32>
    %308 = arith.cmpf olt, %307, %305 : vector<8x128xf32>
    %309 = arith.andi %297, %308 : vector<8x128xi1>
    %310 = arith.select %309, %306, %304 : vector<8x128xi1>, vector<8x128xf32>
    %311 = arith.select %309, %307, %305 : vector<8x128xi1>, vector<8x128xf32>
    %312 = vector.extract_strided_slice %266 {offsets = [24, 0], sizes = [8, 128], strides = [1, 1]} : vector<56x128xf32> to vector<8x128xf32>
    %313 = vector.extract_strided_slice %293 {offsets = [24, 0], sizes = [8, 128], strides = [1, 1]} : vector<56x128xf32> to vector<8x128xf32>
    %314 = arith.cmpf olt, %313, %311 : vector<8x128xf32>
    %315 = arith.andi %297, %314 : vector<8x128xi1>
    %316 = arith.select %315, %312, %310 : vector<8x128xi1>, vector<8x128xf32>
    %317 = arith.select %315, %313, %311 : vector<8x128xi1>, vector<8x128xf32>
    %318 = vector.extract_strided_slice %266 {offsets = [32, 0], sizes = [8, 128], strides = [1, 1]} : vector<56x128xf32> to vector<8x128xf32>
    %319 = vector.extract_strided_slice %293 {offsets = [32, 0], sizes = [8, 128], strides = [1, 1]} : vector<56x128xf32> to vector<8x128xf32>
    %320 = arith.cmpf olt, %319, %317 : vector<8x128xf32>
    %321 = arith.andi %295, %320 : vector<8x128xi1>
    %322 = arith.select %321, %318, %316 : vector<8x128xi1>, vector<8x128xf32>
    %323 = arith.select %321, %319, %317 : vector<8x128xi1>, vector<8x128xf32>
    %324 = vector.extract_strided_slice %266 {offsets = [40, 0], sizes = [8, 128], strides = [1, 1]} : vector<56x128xf32> to vector<8x128xf32>
    %325 = vector.extract_strided_slice %293 {offsets = [40, 0], sizes = [8, 128], strides = [1, 1]} : vector<56x128xf32> to vector<8x128xf32>
    %326 = arith.cmpf olt, %325, %323 : vector<8x128xf32>
    %327 = arith.andi %296, %326 : vector<8x128xi1>
    %328 = arith.select %327, %324, %322 : vector<8x128xi1>, vector<8x128xf32>
    %329 = arith.select %327, %325, %323 : vector<8x128xi1>, vector<8x128xf32>
    %330 = vector.extract_strided_slice %266 {offsets = [48, 0], sizes = [8, 128], strides = [1, 1]} : vector<56x128xf32> to vector<8x128xf32>
    %331 = vector.extract_strided_slice %293 {offsets = [48, 0], sizes = [8, 128], strides = [1, 1]} : vector<56x128xf32> to vector<8x128xf32>
    %332 = arith.cmpf olt, %331, %329 : vector<8x128xf32>
    %333 = arith.andi %296, %332 : vector<8x128xi1>
    %334 = arith.select %333, %330, %328 : vector<8x128xi1>, vector<8x128xf32>
    %335 = arith.select %145, %334, %141 : vector<8x128xi1>, vector<8x128xf32>
    %336 = arith.select %143, %260, %335 : vector<8x128xi1>, vector<8x128xf32>
    %337 = arith.subf %336, %138 : vector<8x128xf32>
    %cst_85 = arith.constant 5.000000e-01 : f32
    %338 = vector.broadcast %cst_85 : f32 to vector<8x128xf32>
    %339 = arith.mulf %337, %338 : vector<8x128xf32>
    %340 = math.absf %339 : vector<8x128xf32>
    %cst_86 = arith.constant 1.000000e+00 : f32
    %341 = vector.broadcast %cst_86 : f32 to vector<8x128xf32>
    %342 = arith.cmpf olt, %340, %341 : vector<8x128xf32>
    %cst_87 = arith.constant 5.000000e-01 : f32
    %343 = vector.broadcast %cst_87 : f32 to vector<8x128xf32>
    %344 = arith.mulf %343, %340 : vector<8x128xf32>
    %345 = arith.mulf %344, %340 : vector<8x128xf32>
    %cst_88 = arith.constant 5.000000e-01 : f32
    %346 = vector.broadcast %cst_88 : f32 to vector<8x128xf32>
    %347 = arith.subf %340, %346 : vector<8x128xf32>
    %348 = arith.select %342, %345, %347 : vector<8x128xi1>, vector<8x128xf32>
    %349 = math.log %336 : vector<8x128xf32>
    %350 = arith.subf %349, %267 : vector<8x128xf32>
    %351 = math.absf %350 : vector<8x128xf32>
    %cst_89 = arith.constant 1.000000e+00 : f32
    %352 = vector.broadcast %cst_89 : f32 to vector<8x128xf32>
    %353 = arith.cmpf olt, %351, %352 : vector<8x128xf32>
    %cst_90 = arith.constant 5.000000e-01 : f32
    %354 = vector.broadcast %cst_90 : f32 to vector<8x128xf32>
    %355 = arith.mulf %354, %351 : vector<8x128xf32>
    %356 = arith.mulf %355, %351 : vector<8x128xf32>
    %cst_91 = arith.constant 5.000000e-01 : f32
    %357 = vector.broadcast %cst_91 : f32 to vector<8x128xf32>
    %358 = arith.subf %351, %357 : vector<8x128xf32>
    %359 = arith.select %353, %356, %358 : vector<8x128xi1>, vector<8x128xf32>
    %360 = arith.addf %348, %359 : vector<8x128xf32>
    %361 = vector.extract_strided_slice %3 {offsets = [0, 0], sizes = [1, 128], strides = [1, 1]} : vector<8x128xf32> to vector<1x128xf32>
    %362 = vector.extract_strided_slice %3 {offsets = [1, 0], sizes = [1, 128], strides = [1, 1]} : vector<8x128xf32> to vector<1x128xf32>
    %363 = vector.extract_strided_slice %336 {offsets = [0, 0], sizes = [1, 128], strides = [1, 1]} : vector<8x128xf32> to vector<1x128xf32>
    %364 = vector.extract_strided_slice %336 {offsets = [1, 0], sizes = [1, 128], strides = [1, 1]} : vector<8x128xf32> to vector<1x128xf32>
    %365 = vector.extract_strided_slice %336 {offsets = [2, 0], sizes = [1, 128], strides = [1, 1]} : vector<8x128xf32> to vector<1x128xf32>
    %366 = vector.extract_strided_slice %336 {offsets = [3, 0], sizes = [1, 128], strides = [1, 1]} : vector<8x128xf32> to vector<1x128xf32>
    %cst_92 = arith.constant 5.000000e-01 : f32
    %367 = vector.broadcast %cst_92 : f32 to vector<1x128xf32>
    %368 = arith.mulf %367, %363 : vector<1x128xf32>
    %369 = arith.addf %82, %368 : vector<1x128xf32>
    %cst_93 = arith.constant 5.000000e-01 : f32
    %370 = vector.broadcast %cst_93 : f32 to vector<1x128xf32>
    %371 = arith.mulf %370, %364 : vector<1x128xf32>
    %372 = arith.subf %93, %371 : vector<1x128xf32>
    %373 = vector.extract_strided_slice %360 {offsets = [2, 0], sizes = [1, 128], strides = [1, 1]} : vector<8x128xf32> to vector<1x128xf32>
    %374 = vector.extract_strided_slice %360 {offsets = [3, 0], sizes = [1, 128], strides = [1, 1]} : vector<8x128xf32> to vector<1x128xf32>
    %375 = arith.cmpf ole, %373, %374 : vector<1x128xf32>
    %cst_94 = arith.constant 5.000000e-01 : f32
    %376 = vector.broadcast %cst_94 : f32 to vector<1x128xf32>
    %377 = arith.mulf %376, %365 : vector<1x128xf32>
    %378 = arith.addf %90, %377 : vector<1x128xf32>
    %cst_95 = arith.constant 5.000000e-01 : f32
    %379 = vector.broadcast %cst_95 : f32 to vector<1x128xf32>
    %380 = arith.mulf %379, %366 : vector<1x128xf32>
    %381 = arith.subf %84, %380 : vector<1x128xf32>
    %382 = arith.select %375, %378, %381 : vector<1x128xi1>, vector<1x128xf32>
    %383 = arith.select %375, %365, %366 : vector<1x128xi1>, vector<1x128xf32>
    %384 = arith.maximumf %99, %102 : vector<1x128xf32>
    %385 = arith.cmpf oge, %62, %384 : vector<1x128xf32>
    %386 = arith.select %385, %51, %382 : vector<1x128xi1>, vector<1x128xf32>
    %387 = arith.select %385, %62, %383 : vector<1x128xi1>, vector<1x128xf32>
    %cst_96 = arith.constant 5.000000e-01 : f32
    %388 = vector.broadcast %cst_96 : f32 to vector<1x128xf32>
    %389 = arith.cmpf ogt, %361, %388 : vector<1x128xf32>
    %cst_97 = arith.constant 5.000000e-01 : f32
    %390 = vector.broadcast %cst_97 : f32 to vector<1x128xf32>
    %391 = arith.cmpf ogt, %362, %390 : vector<1x128xf32>
    %cst_98 = arith.constant dense<true> : vector<1x128xi1>
    %392 = arith.xori %389, %cst_98 : vector<1x128xi1>
    %cst_99 = arith.constant dense<true> : vector<1x128xi1>
    %393 = arith.xori %391, %cst_99 : vector<1x128xi1>
    %394 = arith.andi %392, %393 : vector<1x128xi1>
    %cst_100 = arith.constant dense<true> : vector<1x128xi1>
    %395 = arith.xori %389, %cst_100 : vector<1x128xi1>
    %396 = arith.andi %395, %391 : vector<1x128xi1>
    %cst_101 = arith.constant dense<true> : vector<1x128xi1>
    %397 = arith.xori %391, %cst_101 : vector<1x128xi1>
    %398 = arith.andi %389, %397 : vector<1x128xi1>
    %399 = arith.select %398, %372, %386 : vector<1x128xi1>, vector<1x128xf32>
    %400 = arith.select %396, %369, %399 : vector<1x128xi1>, vector<1x128xf32>
    %401 = arith.select %394, %46, %400 : vector<1x128xi1>, vector<1x128xf32>
    %402 = arith.select %398, %364, %387 : vector<1x128xi1>, vector<1x128xf32>
    %403 = arith.select %396, %363, %402 : vector<1x128xi1>, vector<1x128xf32>
    %404 = arith.select %394, %49, %403 : vector<1x128xi1>, vector<1x128xf32>
    %405 = vector.extract_strided_slice %3 {offsets = [2, 0], sizes = [1, 128], strides = [1, 1]} : vector<8x128xf32> to vector<1x128xf32>
    %406 = vector.extract_strided_slice %3 {offsets = [3, 0], sizes = [1, 128], strides = [1, 1]} : vector<8x128xf32> to vector<1x128xf32>
    %407 = vector.extract_strided_slice %336 {offsets = [4, 0], sizes = [1, 128], strides = [1, 1]} : vector<8x128xf32> to vector<1x128xf32>
    %408 = vector.extract_strided_slice %336 {offsets = [5, 0], sizes = [1, 128], strides = [1, 1]} : vector<8x128xf32> to vector<1x128xf32>
    %409 = vector.extract_strided_slice %336 {offsets = [6, 0], sizes = [1, 128], strides = [1, 1]} : vector<8x128xf32> to vector<1x128xf32>
    %410 = vector.extract_strided_slice %336 {offsets = [7, 0], sizes = [1, 128], strides = [1, 1]} : vector<8x128xf32> to vector<1x128xf32>
    %cst_102 = arith.constant 5.000000e-01 : f32
    %411 = vector.broadcast %cst_102 : f32 to vector<1x128xf32>
    %412 = arith.mulf %411, %407 : vector<1x128xf32>
    %413 = arith.addf %116, %412 : vector<1x128xf32>
    %cst_103 = arith.constant 5.000000e-01 : f32
    %414 = vector.broadcast %cst_103 : f32 to vector<1x128xf32>
    %415 = arith.mulf %414, %408 : vector<1x128xf32>
    %416 = arith.subf %127, %415 : vector<1x128xf32>
    %417 = vector.extract_strided_slice %360 {offsets = [6, 0], sizes = [1, 128], strides = [1, 1]} : vector<8x128xf32> to vector<1x128xf32>
    %418 = vector.extract_strided_slice %360 {offsets = [7, 0], sizes = [1, 128], strides = [1, 1]} : vector<8x128xf32> to vector<1x128xf32>
    %419 = arith.cmpf ole, %417, %418 : vector<1x128xf32>
    %cst_104 = arith.constant 5.000000e-01 : f32
    %420 = vector.broadcast %cst_104 : f32 to vector<1x128xf32>
    %421 = arith.mulf %420, %409 : vector<1x128xf32>
    %422 = arith.addf %124, %421 : vector<1x128xf32>
    %cst_105 = arith.constant 5.000000e-01 : f32
    %423 = vector.broadcast %cst_105 : f32 to vector<1x128xf32>
    %424 = arith.mulf %423, %410 : vector<1x128xf32>
    %425 = arith.subf %118, %424 : vector<1x128xf32>
    %426 = arith.select %419, %422, %425 : vector<1x128xi1>, vector<1x128xf32>
    %427 = arith.select %419, %409, %410 : vector<1x128xi1>, vector<1x128xf32>
    %428 = arith.maximumf %133, %136 : vector<1x128xf32>
    %429 = arith.cmpf oge, %68, %428 : vector<1x128xf32>
    %430 = arith.select %429, %52, %426 : vector<1x128xi1>, vector<1x128xf32>
    %431 = arith.select %429, %68, %427 : vector<1x128xi1>, vector<1x128xf32>
    %cst_106 = arith.constant 5.000000e-01 : f32
    %432 = vector.broadcast %cst_106 : f32 to vector<1x128xf32>
    %433 = arith.cmpf ogt, %405, %432 : vector<1x128xf32>
    %cst_107 = arith.constant 5.000000e-01 : f32
    %434 = vector.broadcast %cst_107 : f32 to vector<1x128xf32>
    %435 = arith.cmpf ogt, %406, %434 : vector<1x128xf32>
    %cst_108 = arith.constant dense<true> : vector<1x128xi1>
    %436 = arith.xori %433, %cst_108 : vector<1x128xi1>
    %cst_109 = arith.constant dense<true> : vector<1x128xi1>
    %437 = arith.xori %435, %cst_109 : vector<1x128xi1>
    %438 = arith.andi %436, %437 : vector<1x128xi1>
    %cst_110 = arith.constant dense<true> : vector<1x128xi1>
    %439 = arith.xori %433, %cst_110 : vector<1x128xi1>
    %440 = arith.andi %439, %435 : vector<1x128xi1>
    %cst_111 = arith.constant dense<true> : vector<1x128xi1>
    %441 = arith.xori %435, %cst_111 : vector<1x128xi1>
    %442 = arith.andi %433, %441 : vector<1x128xi1>
    %443 = arith.select %442, %416, %430 : vector<1x128xi1>, vector<1x128xf32>
    %444 = arith.select %440, %413, %443 : vector<1x128xi1>, vector<1x128xf32>
    %445 = arith.select %438, %48, %444 : vector<1x128xi1>, vector<1x128xf32>
    %446 = arith.select %442, %408, %431 : vector<1x128xi1>, vector<1x128xf32>
    %447 = arith.select %440, %407, %446 : vector<1x128xi1>, vector<1x128xf32>
    %448 = arith.select %438, %50, %447 : vector<1x128xi1>, vector<1x128xf32>
    %449 = tpu.concatenate %62, %68, %404, %448 in 0 : vector<1x128xf32>, vector<1x128xf32>, vector<1x128xf32>, vector<1x128xf32> -> vector<4x128xf32>
    %450 = math.log %449 : vector<4x128xf32>
    %451 = vector.extract_strided_slice %450 {offsets = [0, 0], sizes = [1, 128], strides = [1, 1]} : vector<4x128xf32> to vector<1x128xf32>
    %452 = vector.extract_strided_slice %450 {offsets = [1, 0], sizes = [1, 128], strides = [1, 1]} : vector<4x128xf32> to vector<1x128xf32>
    %453 = tpu.concatenate %51, %52, %451, %452 in 0 : vector<1x128xf32>, vector<1x128xf32>, vector<1x128xf32>, vector<1x128xf32> -> vector<4x128xf32>
    %454 = vector.extract_strided_slice %450 {offsets = [2, 0], sizes = [1, 128], strides = [1, 1]} : vector<4x128xf32> to vector<1x128xf32>
    %455 = vector.extract_strided_slice %450 {offsets = [3, 0], sizes = [1, 128], strides = [1, 1]} : vector<4x128xf32> to vector<1x128xf32>
    %456 = tpu.concatenate %401, %445, %454, %455 in 0 : vector<1x128xf32>, vector<1x128xf32>, vector<1x128xf32>, vector<1x128xf32> -> vector<4x128xf32>
    %457 = arith.subf %453, %456 : vector<4x128xf32>
    %458 = math.absf %457 : vector<4x128xf32>
    %cst_112 = arith.constant 1.000000e+00 : f32
    %459 = vector.broadcast %cst_112 : f32 to vector<4x128xf32>
    %460 = arith.cmpf olt, %458, %459 : vector<4x128xf32>
    %461 = arith.mulf %458, %458 : vector<4x128xf32>
    %cst_113 = arith.constant 5.000000e-01 : f32
    %462 = vector.broadcast %cst_113 : f32 to vector<4x128xf32>
    %463 = arith.mulf %461, %462 : vector<4x128xf32>
    %cst_114 = arith.constant 5.000000e-01 : f32
    %464 = vector.broadcast %cst_114 : f32 to vector<4x128xf32>
    %465 = arith.subf %458, %464 : vector<4x128xf32>
    %466 = arith.select %460, %463, %465 : vector<4x128xi1>, vector<4x128xf32>
    %467 = tpu.iota {dimensions = array<i32: 0>} : vector<4x128xi32>
    %c2_i32 = arith.constant 2 : i32
    %468 = vector.broadcast %c2_i32 : i32 to vector<4x128xi32>
    %469 = arith.cmpi sge, %467, %468 : vector<4x128xi32>
    %cst_115 = arith.constant 1.000000e+02 : f32
    %470 = vector.broadcast %cst_115 : f32 to vector<4x128xf32>
    %471 = arith.cmpf oge, %466, %470 : vector<4x128xf32>
    %472 = arith.andi %469, %471 : vector<4x128xi1>
    %cst_116 = arith.constant 1.000000e+02 : f32
    %473 = vector.broadcast %cst_116 : f32 to vector<4x128xf32>
    %474 = arith.select %472, %473, %466 : vector<4x128xi1>, vector<4x128xf32>
    %cst_117 = arith.constant 0.000000e+00 : f32
    %475 = vector.broadcast %cst_117 : f32 to vector<4x128xf32>
    %476 = tpu.concatenate %474, %475 in 0 : vector<4x128xf32>, vector<4x128xf32> -> vector<8x128xf32>
    %c0_118 = arith.constant 0 : index
    %c0_119 = arith.constant 0 : index
    %477 = vector.load %arg6[%c0_118, %c0_119] : memref<8x128xf32, #tpu.memory_space<vmem>>, vector<8x128xf32>
    tpu.vector_store %arg6[%c0_118, %c0_119], %476 {strides = array<i32>} : memref<8x128xf32, #tpu.memory_space<vmem>>, vector<8x128xf32>,
    return
  }
  func.func @transform_0(%arg0: i32) -> (i32, i32) {
    %c0_i32 = arith.constant 0 : i32
    %c0_i32_0 = arith.constant 0 : i32
    return %c0_i32, %arg0 : i32, i32
  }
  func.func @transform_1(%arg0: i32) -> (i32, i32) {
    %c0_i32 = arith.constant 0 : i32
    %c0_i32_0 = arith.constant 0 : i32
    return %c0_i32, %arg0 : i32, i32
  }
  func.func @transform_2(%arg0: i32) -> (i32, i32) {
    %c0_i32 = arith.constant 0 : i32
    %c0_i32_0 = arith.constant 0 : i32
    return %c0_i32, %arg0 : i32, i32
  }
  func.func @transform_3(%arg0: i32) -> (i32, i32) {
    %c0_i32 = arith.constant 0 : i32
    %c0_i32_0 = arith.constant 0 : i32
    return %c0_i32, %arg0 : i32, i32
  }
  func.func @transform_4(%arg0: i32) -> (i32, i32) {
    %c0_i32 = arith.constant 0 : i32
    %c0_i32_0 = arith.constant 0 : i32
    return %c0_i32, %arg0 : i32, i32
  }
  func.func @transform_5(%arg0: i32) -> (i32, i32) {
    %c0_i32 = arith.constant 0 : i32
    %c0_i32_0 = arith.constant 0 : i32
    return %c0_i32, %arg0 : i32, i32
  }
}

</mosaic_0001>

<llo_original>
// kernel: tpu_custom_call.1
$region0: #{tpu_custom_call.1}
  #allocation0 [shape = 'u32[]', space=smem, size = 0x4, offset = 0x4, fixed_abs, tag = 'smem constant byte address 0x4 - core index']
  #allocation1 [shape = 'u32[144,128]{1,0:T(1,128)}', space=vmem, size = 0x12000, scoped, tag = 'internal scratch']
  %s0 = inlined_call_operand.hbm [shape: f32[8,256], index: 0, kind: input, shape index: {}]
  %s1 = inlined_call_operand.hbm [shape: f32[8,256], index: 1, kind: input, shape index: {}]
  %s2 = inlined_call_operand.hbm [shape: f32[8,256], index: 2, kind: input, shape index: {}]
  %s3 = inlined_call_operand.hbm [shape: f32[8,256], index: 3, kind: input, shape index: {}]
  %s4 = inlined_call_operand.hbm [shape: f32[8,256], index: 4, kind: input, shape index: {}]
  %s5 = inlined_call_operand.hbm [shape: f32[8,256], index: 5, kind: output, shape index: {}]
  %s6 = sld [smem:[#allocation0]]
  $region80: #{tpu_custom_call.1} parent=0
    _
  %s8 = ssub.s32 1, %s6
  %s9 = scalar_select 0, %s8, %s6
  $region1: #{tpu_custom_call.1} parent=0
    #allocation2 [shape = 'u8[8192]{0}', space=vmem, size = 0x2000, scoped, tag = 'input window, operand 0']
    #allocation3 [shape = 's32[2]{0}', space=sflag, size = 0x8, scoped, tag = 'scoped memory for tpu_custom_call.1']
    #allocation4 [shape = 's32[2]{0}', space=sflag, size = 0x8, scoped, tag = 'scoped memory for tpu_custom_call.1']
    #allocation5 [shape = 'u8[8192]{0}', space=vmem, size = 0x2000, scoped, tag = 'input window, operand 1']
    #allocation6 [shape = 's32[2]{0}', space=sflag, size = 0x8, scoped, tag = 'scoped memory for tpu_custom_call.1']
    #allocation7 [shape = 'u8[8192]{0}', space=vmem, size = 0x2000, scoped, tag = 'input window, operand 2']
    #allocation8 [shape = 'u8[8192]{0}', space=vmem, size = 0x2000, scoped, tag = 'input window, operand 3']
    #allocation9 [shape = 's32[2]{0}', space=sflag, size = 0x8, scoped, tag = 'scoped memory for tpu_custom_call.1']
    #allocation10 [shape = 'u8[8192]{0}', space=vmem, size = 0x2000, scoped, tag = 'input window, operand 4']
    #allocation11 [shape = 'u8[8192]{0}', space=vmem, size = 0x2000, scoped, tag = 'output window, operand 0']
    %10 = vsyncpa [#allocation3], 0
    %s11 = scalar_lea.sflag [#allocation3], 1
    %12 = vsyncpa %s11, 0
    %13 = vsyncpa [#allocation6], 0
    %s14 = scalar_lea.sflag [#allocation6], 1
    %15 = vsyncpa %s14, 0
    %16 = vsyncpa [#allocation9], 0
    %s17 = scalar_lea.sflag [#allocation9], 1
    %18 = vsyncpa %s17, 0
    %19 = vsyncpa [#allocation4], 0
    %s20 = scalar_lea.sflag [#allocation4], 1
    %21 = vsyncpa %s20, 0
    loop: start=0, step=1, limit=4
    $region2: #{tpu_custom_call.1} parent=1 // loop_pre_header
      _
    $region3: #{tpu_custom_call.1} parent=1 // loop_header
      %s23 = sphi 0, %s27
      %p24 = scmp.ge.s32.totalorder %s23, 4
      %s33 = sphi 0, %s35
      %s36 = sphi 0, %s33
      %s37 = sphi 0, %s36
      %s53 = sphi 0, %s37
      %s59 = sphi 0, %s61
      %s62 = sphi 0, %s59
      %s63 = sphi 0, %s62
      %s79 = sphi 0, %s63
      %s85 = sphi 0, %s87
      %s88 = sphi 0, %s85
      %s89 = sphi 0, %s88
      %s105 = sphi 0, %s89
      %s111 = sphi 0, %s113
      %s114 = sphi 0, %s111
      %s115 = sphi 0, %s114
      %s131 = sphi 0, %s115
      %s137 = sphi 0, %s139
      %s140 = sphi 0, %s137
      %s141 = sphi 0, %s140
      %s157 = sphi 0, %s141
      %s163 = sphi 0, %s165
      %s166 = sphi 0, %s163
      %s167 = sphi 0, %s166
      %s183 = sphi 0, %s167
    $region4: #{tpu_custom_call.1} parent=1 // loop_header_branch
      %26 = sbr.rel (%p24) target = $region8
    $region5: #{tpu_custom_call.1} parent=1 // loop_body
      %s28 = ssub.s32 %s23, 1
      %s29 = ssub.s32 %s23, 2
      %s30 = sadd.s32 %s23, 1
      %s31 = ssub.s32 %s23, %s30
      %p32 = scmp.eq.s32.totalorder %s31, 0
      %s34 = sadd.s32 %s33, 1
      %s35 = scalar_select %p32, %s33, %s34
      %p38 = pneg %p32
      %p39 = scmp.eq.s32.totalorder %s23, 1
      %p40 = por %p38, %p39
      %p41 = scmp.ne.s32.totalorder %s33, %s36
      %p42 = scmp.eq.s32.totalorder %s23, 0
      %p43 = por %p41, %p42
      %p44 = scmp.ne.s32.totalorder %s33, %s36
      %p45 = scmp.eq.s32.totalorder %s28, 1
      %p46 = por %p44, %p45
      %p47 = scmp.ne.s32.totalorder %s36, %s37
      %p48 = scmp.eq.s32.totalorder %s28, 0
      %p49 = por %p47, %p48
      %p50 = scmp.ne.s32.totalorder %s36, %s37
      %p51 = scmp.eq.s32.totalorder %s29, 1
      %p52 = por %p50, %p51
      %p54 = scmp.ne.s32.totalorder %s37, %s53
      %p55 = scmp.eq.s32.totalorder %s29, 0
      %p56 = por %p54, %p55
      %s57 = ssub.s32 %s23, %s30
      %p58 = scmp.eq.s32.totalorder %s57, 0
      %s60 = sadd.s32 %s59, 1
      %s61 = scalar_select %p58, %s59, %s60
      %p64 = pneg %p58
      %p65 = scmp.eq.s32.totalorder %s23, 1
      %p66 = por %p64, %p65
      %p67 = scmp.ne.s32.totalorder %s59, %s62
      %p68 = scmp.eq.s32.totalorder %s23, 0
      %p69 = por %p67, %p68
      %p70 = scmp.ne.s32.totalorder %s59, %s62
      %p71 = scmp.eq.s32.totalorder %s28, 1
      %p72 = por %p70, %p71
      %p73 = scmp.ne.s32.totalorder %s62, %s63
      %p74 = scmp.eq.s32.totalorder %s28, 0
      %p75 = por %p73, %p74
      %p76 = scmp.ne.s32.totalorder %s62, %s63
      %p77 = scmp.eq.s32.totalorder %s29, 1
      %p78 = por %p76, %p77
      %p80 = scmp.ne.s32.totalorder %s63, %s79
      %p81 = scmp.eq.s32.totalorder %s29, 0
      %p82 = por %p80, %p81
      %s83 = ssub.s32 %s23, %s30
      %p84 = scmp.eq.s32.totalorder %s83, 0
      %s86 = sadd.s32 %s85, 1
      %s87 = scalar_select %p84, %s85, %s86
      %p90 = pneg %p84
      %p91 = scmp.eq.s32.totalorder %s23, 1
      %p92 = por %p90, %p91
      %p93 = scmp.ne.s32.totalorder %s85, %s88
      %p94 = scmp.eq.s32.totalorder %s23, 0
      %p95 = por %p93, %p94
      %p96 = scmp.ne.s32.totalorder %s85, %s88
      %p97 = scmp.eq.s32.totalorder %s28, 1
      %p98 = por %p96, %p97
      %p99 = scmp.ne.s32.totalorder %s88, %s89
      %p100 = scmp.eq.s32.totalorder %s28, 0
      %p101 = por %p99, %p100
      %p102 = scmp.ne.s32.totalorder %s88, %s89
      %p103 = scmp.eq.s32.totalorder %s29, 1
      %p104 = por %p102, %p103
      %p106 = scmp.ne.s32.totalorder %s89, %s105
      %p107 = scmp.eq.s32.totalorder %s29, 0
      %p108 = por %p106, %p107
      %s109 = ssub.s32 %s23, %s30
      %p110 = scmp.eq.s32.totalorder %s109, 0
      %s112 = sadd.s32 %s111, 1
      %s113 = scalar_select %p110, %s111, %s112
      %p116 = pneg %p110
      %p117 = scmp.eq.s32.totalorder %s23, 1
      %p118 = por %p116, %p117
      %p119 = scmp.ne.s32.totalorder %s111, %s114
      %p120 = scmp.eq.s32.totalorder %s23, 0
      %p121 = por %p119, %p120
      %p122 = scmp.ne.s32.totalorder %s111, %s114
      %p123 = scmp.eq.s32.totalorder %s28, 1
      %p124 = por %p122, %p123
      %p125 = scmp.ne.s32.totalorder %s114, %s115
      %p126 = scmp.eq.s32.totalorder %s28, 0
      %p127 = por %p125, %p126
      %p128 = scmp.ne.s32.totalorder %s114, %s115
      %p129 = scmp.eq.s32.totalorder %s29, 1
      %p130 = por %p128, %p129
      %p132 = scmp.ne.s32.totalorder %s115, %s131
      %p133 = scmp.eq.s32.totalorder %s29, 0
      %p134 = por %p132, %p133
      %s135 = ssub.s32 %s23, %s30
      %p136 = scmp.eq.s32.totalorder %s135, 0
      %s138 = sadd.s32 %s137, 1
      %s139 = scalar_select %p136, %s137, %s138
      %p142 = pneg %p136
      %p143 = scmp.eq.s32.totalorder %s23, 1
      %p144 = por %p142, %p143
      %p145 = scmp.ne.s32.totalorder %s137, %s140
      %p146 = scmp.eq.s32.totalorder %s23, 0
      %p147 = por %p145, %p146
      %p148 = scmp.ne.s32.totalorder %s137, %s140
      %p149 = scmp.eq.s32.totalorder %s28, 1
      %p150 = por %p148, %p149
      %p151 = scmp.ne.s32.totalorder %s140, %s141
      %p152 = scmp.eq.s32.totalorder %s28, 0
      %p153 = por %p151, %p152
      %p154 = scmp.ne.s32.totalorder %s140, %s141
      %p155 = scmp.eq.s32.totalorder %s29, 1
      %p156 = por %p154, %p155
      %p158 = scmp.ne.s32.totalorder %s141, %s157
      %p159 = scmp.eq.s32.totalorder %s29, 0
      %p160 = por %p158, %p159
      %s161 = ssub.s32 %s23, %s30
      %p162 = scmp.eq.s32.totalorder %s161, 0
      %s164 = sadd.s32 %s163, 1
      %s165 = scalar_select %p162, %s163, %s164
      %p168 = pneg %p162
      %p169 = scmp.eq.s32.totalorder %s23, 1
      %p170 = por %p168, %p169
      %p171 = scmp.ne.s32.totalorder %s163, %s166
      %p172 = scmp.eq.s32.totalorder %s23, 0
      %p173 = por %p171, %p172
      %p174 = scmp.ne.s32.totalorder %s163, %s166
      %p175 = scmp.eq.s32.totalorder %s28, 1
      %p176 = por %p174, %p175
      %p177 = scmp.ne.s32.totalorder %s166, %s167
      %p178 = scmp.eq.s32.totalorder %s28, 0
      %p179 = por %p177, %p178
      %p180 = scmp.ne.s32.totalorder %s166, %s167
      %p181 = scmp.eq.s32.totalorder %s29, 1
      %p182 = por %p180, %p181
      %p184 = scmp.ne.s32.totalorder %s167, %s183
      %p185 = scmp.eq.s32.totalorder %s29, 0
      %p186 = por %p184, %p185
      %p187 = scmp.le.s32.totalorder 1, %s23
      %p188 = scmp.lt.s32.totalorder %s23, 3
      %p189 = pnand %p187, %p188
      %p190 = pneg %p189
      // Predicated region
      $region9: #{tpu_custom_call.1} parent=5 // pred_check
        _
      $region10: #{tpu_custom_call.1} parent=5 // pred_check_branch
        %192 = sbr.rel (%p189) target = $region12
      $region11: #{tpu_custom_call.1} parent=5 // pred_region
        %s193 = ssub.s32 %s23, 1
      $region12: #{tpu_custom_call.1} parent=5 // pred_fallthru
        _
      %p194 = scmp.lt.s32.totalorder %s23, 2
      // Predicated region
      $region13: #{tpu_custom_call.1} parent=5 // pred_check
        %p195 = pneg %p194
      $region14: #{tpu_custom_call.1} parent=5 // pred_check_branch
        %197 = sbr.rel (%p195) target = $region16
      $region15: #{tpu_custom_call.1} parent=5 // pred_region
        // Predicated region
        $region17: #{tpu_custom_call.1} parent=15 // pred_check
          %p198 = pneg %p43
        $region18: #{tpu_custom_call.1} parent=15 // pred_check_branch
          %200 = sbr.rel (%p198) target = $region20
        $region19: #{tpu_custom_call.1} parent=15 // pred_region
          %s201 = sand.u32 %s33, 1
          %s202 = scalar_lea.sflag [#allocation3], %s201
          %s203 = sand.u32 %s33, 1
          %s204 = smul.addr %s203, 8
          %s205 = scalar_lea.vmem [#allocation2], %s204
          %s207 = ssub.s32 128, 128
          %208 = vsyncadd %s202, %s207
          %s209 = smul.addr %s23, 128
          %s210 = scalar_lea.hbm %s0, %s209
          %s212 = sshll.u32 %s205, 4
          %s213 = int_to_ptr.vmem [resolvable:$true] %s212
          %215 = dma.hbm_to_vmem [thread:$0]  %s210, 128, %s213, %s202
        $region20: #{tpu_custom_call.1} parent=15 // pred_fallthru
          _
        // Predicated region
        $region21: #{tpu_custom_call.1} parent=15 // pred_check
          %p216 = pneg %p69
        $region22: #{tpu_custom_call.1} parent=15 // pred_check_branch
          %218 = sbr.rel (%p216) target = $region24
        $region23: #{tpu_custom_call.1} parent=15 // pred_region
          %s219 = sand.u32 %s23, 1
          %s220 = scalar_lea.sflag [#allocation6], %s219
          %s221 = sand.u32 %s59, 1
          %s222 = smul.addr %s221, 8
          %s223 = scalar_lea.vmem [#allocation5], %s222
          %s225 = ssub.s32 128, 128
          %226 = vsyncadd %s220, %s225
          %s227 = smul.addr %s23, 128
          %s228 = scalar_lea.hbm %s1, %s227
          %s230 = sshll.u32 %s223, 4
          %s231 = int_to_ptr.vmem [resolvable:$true] %s230
          %233 = dma.hbm_to_vmem [thread:$0]  %s228, 128, %s231, %s220
        $region24: #{tpu_custom_call.1} parent=15 // pred_fallthru
          _
        // Predicated region
        $region25: #{tpu_custom_call.1} parent=15 // pred_check
          %p234 = pneg %p95
        $region26: #{tpu_custom_call.1} parent=15 // pred_check_branch
          %236 = sbr.rel (%p234) target = $region28
        $region27: #{tpu_custom_call.1} parent=15 // pred_region
          %s237 = sand.u32 %s23, 1
          %s238 = scalar_lea.sflag [#allocation6], %s237
          %s239 = sand.u32 %s85, 1
          %s240 = smul.addr %s239, 8
          %s241 = scalar_lea.vmem [#allocation7], %s240
          %s243 = ssub.s32 128, 128
          %244 = vsyncadd %s238, %s243
          %s245 = smul.addr %s23, 128
          %s246 = scalar_lea.hbm %s2, %s245
          %s248 = sshll.u32 %s241, 4
          %s249 = int_to_ptr.vmem [resolvable:$true] %s248
          %251 = dma.hbm_to_vmem [thread:$0]  %s246, 128, %s249, %s238
        $region28: #{tpu_custom_call.1} parent=15 // pred_fallthru
          _
        // Predicated region
        $region29: #{tpu_custom_call.1} parent=15 // pred_check
          %p252 = pneg %p121
        $region30: #{tpu_custom_call.1} parent=15 // pred_check_branch
          %254 = sbr.rel (%p252) target = $region32
        $region31: #{tpu_custom_call.1} parent=15 // pred_region
          %s255 = sand.u32 %s23, 1
          %s256 = scalar_lea.sflag [#allocation9], %s255
          %s257 = sand.u32 %s111, 1
          %s258 = smul.addr %s257, 8
          %s259 = scalar_lea.vmem [#allocation8], %s258
          %s261 = ssub.s32 128, 128
          %262 = vsyncadd %s256, %s261
          %s263 = smul.addr %s23, 128
          %s264 = scalar_lea.hbm %s3, %s263
          %s266 = sshll.u32 %s259, 4
          %s267 = int_to_ptr.vmem [resolvable:$true] %s266
          %269 = dma.hbm_to_vmem [thread:$0]  %s264, 128, %s267, %s256
        $region32: #{tpu_custom_call.1} parent=15 // pred_fallthru
          _
        // Predicated region
        $region33: #{tpu_custom_call.1} parent=15 // pred_check
          %p270 = pneg %p147
        $region34: #{tpu_custom_call.1} parent=15 // pred_check_branch
          %272 = sbr.rel (%p270) target = $region36
        $region35: #{tpu_custom_call.1} parent=15 // pred_region
          %s273 = sand.u32 %s23, 1
          %s274 = scalar_lea.sflag [#allocation9], %s273
          %s275 = sand.u32 %s137, 1
          %s276 = smul.addr %s275, 8
          %s277 = scalar_lea.vmem [#allocation10], %s276
          %s279 = ssub.s32 128, 128
          %280 = vsyncadd %s274, %s279
          %s281 = smul.addr %s23, 128
          %s282 = scalar_lea.hbm %s4, %s281
          %s284 = sshll.u32 %s277, 4
          %s285 = int_to_ptr.vmem [resolvable:$true] %s284
          %287 = dma.hbm_to_vmem [thread:$0]  %s282, 128, %s285, %s274
        $region36: #{tpu_custom_call.1} parent=15 // pred_fallthru
          _
      $region16: #{tpu_custom_call.1} parent=5 // pred_fallthru
        _
      %p288 = scmp.le.s32.totalorder 1, %s23
      %p289 = scmp.lt.s32.totalorder %s23, 3
      %p290 = pnand %p288, %p289
      %p291 = pneg %p290
      // Predicated region
      $region37: #{tpu_custom_call.1} parent=5 // pred_check
        _
      $region38: #{tpu_custom_call.1} parent=5 // pred_check_branch
        %293 = sbr.rel (%p290) target = $region40
      $region39: #{tpu_custom_call.1} parent=5 // pred_region
        %s294 = ssub.s32 %s23, 1
        %s295 = sand.u32 %s36, 1
        %s296 = scalar_lea.sflag [#allocation3], %s295
        %s297 = sand.u32 %s36, 1
        %s298 = smul.addr %s297, 8
        %s299 = scalar_lea.vmem [#allocation2], %s298
        // Predicated region
        $region41: #{tpu_custom_call.1} parent=39 // pred_check
          %p300 = pneg %p49
        $region42: #{tpu_custom_call.1} parent=39 // pred_check_branch
          %302 = sbr.rel (%p300) target = $region44
        $region43: #{tpu_custom_call.1} parent=39 // pred_region
          %303 = dma.done %s296, 128
        $region44: #{tpu_custom_call.1} parent=39 // pred_fallthru
          _
        %s304 = sand.u32 %s28, 1
        %s305 = scalar_lea.sflag [#allocation6], %s304
        %s306 = sand.u32 %s62, 1
        %s307 = smul.addr %s306, 8
        %s308 = scalar_lea.vmem [#allocation5], %s307
        // Predicated region
        $region45: #{tpu_custom_call.1} parent=39 // pred_check
          %p309 = pneg %p75
        $region46: #{tpu_custom_call.1} parent=39 // pred_check_branch
          %311 = sbr.rel (%p309) target = $region48
        $region47: #{tpu_custom_call.1} parent=39 // pred_region
          %312 = dma.done %s305, 128
        $region48: #{tpu_custom_call.1} parent=39 // pred_fallthru
          _
        %s313 = sand.u32 %s28, 1
        %s314 = scalar_lea.sflag [#allocation6], %s313
        %s315 = sand.u32 %s88, 1
        %s316 = smul.addr %s315, 8
        %s317 = scalar_lea.vmem [#allocation7], %s316
        // Predicated region
        $region49: #{tpu_custom_call.1} parent=39 // pred_check
          %p318 = pneg %p101
        $region50: #{tpu_custom_call.1} parent=39 // pred_check_branch
          %320 = sbr.rel (%p318) target = $region52
        $region51: #{tpu_custom_call.1} parent=39 // pred_region
          %321 = dma.done %s314, 128
        $region52: #{tpu_custom_call.1} parent=39 // pred_fallthru
          _
        %s322 = sand.u32 %s28, 1
        %s323 = scalar_lea.sflag [#allocation9], %s322
        %s324 = sand.u32 %s114, 1
        %s325 = smul.addr %s324, 8
        %s326 = scalar_lea.vmem [#allocation8], %s325
        // Predicated region
        $region53: #{tpu_custom_call.1} parent=39 // pred_check
          %p327 = pneg %p127
        $region54: #{tpu_custom_call.1} parent=39 // pred_check_branch
          %329 = sbr.rel (%p327) target = $region56
        $region55: #{tpu_custom_call.1} parent=39 // pred_region
          %330 = dma.done %s323, 128
        $region56: #{tpu_custom_call.1} parent=39 // pred_fallthru
          _
        %s331 = sand.u32 %s28, 1
        %s332 = scalar_lea.sflag [#allocation9], %s331
        %s333 = sand.u32 %s140, 1
        %s334 = smul.addr %s333, 8
        %s335 = scalar_lea.vmem [#allocation10], %s334
        // Predicated region
        $region57: #{tpu_custom_call.1} parent=39 // pred_check
          %p336 = pneg %p153
        $region58: #{tpu_custom_call.1} parent=39 // pred_check_branch
          %338 = sbr.rel (%p336) target = $region60
        $region59: #{tpu_custom_call.1} parent=39 // pred_region
          %339 = dma.done %s332, 128
        $region60: #{tpu_custom_call.1} parent=39 // pred_fallthru
          _
        %s340 = sand.u32 %s36, 1
        %s341 = scalar_lea.sflag [#allocation3], %s340
        %s342 = sand.u32 %s36, 1
        %s343 = smul.addr %s342, 8
        %s344 = scalar_lea.vmem [#allocation2], %s343
        %p345 = pneg %p49
        %p346 = pneg %p46
        %s347 = sand.u32 %s28, 1
        %s348 = scalar_lea.sflag [#allocation6], %s347
        %s349 = sand.u32 %s62, 1
        %s350 = smul.addr %s349, 8
        %s351 = scalar_lea.vmem [#allocation5], %s350
        %p352 = pneg %p75
        %p353 = pneg %p72
        %s354 = sand.u32 %s28, 1
        %s355 = scalar_lea.sflag [#allocation6], %s354
        %s356 = sand.u32 %s88, 1
        %s357 = smul.addr %s356, 8
        %s358 = scalar_lea.vmem [#allocation7], %s357
        %p359 = pneg %p101
        %p360 = pneg %p98
        %s361 = sand.u32 %s28, 1
        %s362 = scalar_lea.sflag [#allocation9], %s361
        %s363 = sand.u32 %s114, 1
        %s364 = smul.addr %s363, 8
        %s365 = scalar_lea.vmem [#allocation8], %s364
        %p366 = pneg %p127
        %p367 = pneg %p124
        %s368 = sand.u32 %s28, 1
        %s369 = scalar_lea.sflag [#allocation9], %s368
        %s370 = sand.u32 %s140, 1
        %s371 = smul.addr %s370, 8
        %s372 = scalar_lea.vmem [#allocation10], %s371
        %p373 = pneg %p153
        %p374 = pneg %p150
        %p375 = pneg %p179
        %p376 = pneg %p176
        %s377 = sand.u32 %s166, 1
        %s378 = scalar_lea.sflag [#allocation4], %s377
        %s379 = sand.u32 %s166, 1
        %s380 = smul.addr %s379, 8
        %s381 = scalar_lea.vmem [#allocation11], %s380
        %v382 = vld [vmem:[%s299] sm:$0xff]
        %v383 = vld [vmem:[%s308] sm:$0xff]
        %v384 = vld [vmem:[%s317] sm:$0xff]
        %v385 = vld [vmem:[%s326] sm:$0xff]
        %v386 = vld [vmem:[%s335] sm:$0xff]
        %v388 = vrot.slane %v383, 2
        %v390 = vadd.f32 %v383, %v388
        %v391 = vmul.f32 %v390, 0.5
        %v392 = vrot.slane %v383, 6
        %v394 = vsub.f32 %v383, %v392
        %v395 = vadd.f32 %v394, 1.0
        %v397 = vrot.slane %v384, 2
        %v399 = vadd.f32 %v384, %v397
        %v400 = vmul.f32 %v399, 0.5
        %v401 = vrot.slane %v384, 6
        %v403 = vsub.f32 %v384, %v401
        %v404 = vadd.f32 %v403, 1.0
        %v405 = vsub.f32 %v400, %v391
        %v407 = vrot.slane %v395, 2
        %v409 = vrcp.pop %v407
        %v410 = vmul.f32 %v405, %v409
        %v411 = vrcp.pop %v395
        %v412 = vmul.f32 %v404, %v411
        %v413 = vmul.f32 %v382, 1.442695
        %v414 = vpow.pop %v413
        %vm415 = vcmp.le.f32.partialorder %v414, 0.0
        %v416 = vmin.f32 %v414, 1e+10
        %v417 = vsel %vm415, 1e-06, %v416
        %v418 = vadd.f32 %v391, 0.5
        %v419 = vmul.f32 %v412, 0.5
        %v421 = vrot.slane %v419, 2
        %v423 = vsub.f32 %v410, %v421
        %v424 = vsub.f32 %v386, %v418
        %v425 = vmul.f32 %v424, %v409
        %v426 = vsub.f32 %v382, %v423
        %v427 = vmul.f32 %v426, 2.0
        %v428 = vsub.f32 0.0, %v418
        %v429 = vmul.f32 %v428, %v409
        %v430 = vadd.f32 %v410, %v421
        %v431 = vsub.f32 %v430, %v382
        %v432 = vmul.f32 %v431, 2.0
        %v433 = vsub.f32 %v382, %v429
        %v434 = vmul.f32 %v433, 2.0
        %v435 = vsub.f32 %v425, %v382
        %v436 = vmul.f32 %v435, 2.0
        %v438 = vrot.slane %v417, 2
        %v440 = vrot.slane %v417, 1
        %v442 = vrot.slane %v417, 7
        %v444 = vrot.slane %v417, 6
        %v446 = vrot.slane %v417, 5
        %v448 = vrot.slane %v417, 4
        %vm450 = vcmask 1040384
        %v451 = vsel %vm450, %v438, %v440
        %vm452 = vcmask 1041408
        %v453 = vsel %vm452, %v451, %v417
        %vm454 = vcmask 1042432
        %v455 = vsel %vm454, %v453, %v442
        %vm456 = vcmask 1043456
        %v457 = vsel %vm456, %v455, %v442
        %vm458 = vcmask 1044480
        %v459 = vsel %vm458, %v457, %v444
        %vm460 = vcmask 1045504
        %v461 = vsel %vm460, %v459, %v446
        %vm462 = vcmask 1046528
        %v463 = vsel %vm462, %v461, %v448
        %v465 = vrot.slane %v432, 7
        %v468 = vrot.slane %v434, 6
        %v471 = vrot.slane %v436, 5
        %v474 = vrot.slane %v427, 5
        %v476 = vrot.slane %v432, 4
        %v478 = vrot.slane %v434, 3
        %v480 = vrot.slane %v436, 2
        %v482 = vsel %vm450, %v427, %v465
        %v483 = vsel %vm452, %v482, %v468
        %v484 = vsel %vm454, %v483, %v471
        %v485 = vsel %vm456, %v484, %v474
        %v486 = vsel %vm458, %v485, %v476
        %v487 = vsel %vm460, %v486, %v478
        %v488 = vsel %vm462, %v487, %v480
        %v490 = vrot.slane %v429, 7
        %v492 = vrot.slane %v429, 6
        %v494 = vrot.slane %v429, 5
        %v497 = vrot.slane %v423, 5
        %v499 = vrot.slane %v429, 4
        %v501 = vrot.slane %v429, 3
        %v503 = vrot.slane %v429, 2
        %v505 = vsel %vm450, %v423, %v490
        %v506 = vsel %vm452, %v505, %v492
        %v507 = vsel %vm454, %v506, %v494
        %v508 = vsel %vm456, %v507, %v497
        %v509 = vsel %vm458, %v508, %v499
        %v510 = vsel %vm460, %v509, %v501
        %v511 = vsel %vm462, %v510, %v503
        %v513 = vrot.slane %v430, 7
        %v516 = vrot.slane %v425, 6
        %v518 = vrot.slane %v425, 5
        %v520 = vrot.slane %v430, 4
        %v522 = vrot.slane %v425, 3
        %v524 = vrot.slane %v425, 2
        %v526 = vsel %vm450, %v425, %v513
        %v527 = vsel %vm452, %v526, %v516
        %v528 = vsel %vm454, %v527, %v518
        %v529 = vsel %vm456, %v528, %v518
        %v530 = vsel %vm458, %v529, %v520
        %v531 = vsel %vm460, %v530, %v522
        %v532 = vsel %vm462, %v531, %v524
        %v533 = vsub.f32 %v532, %v511
        %v534 = vmax.f32 %v533, %v488
        %vm535 = vcmp.lt.f32.partialorder %v534, %v463
        %v536 = vmax.f32 %v533, %v463
        %vm537 = vcmp.lt.f32.partialorder %v536, %v488
        %v538 = vmul.f32 %v463, 2.7182817
        %v539 = vmin.f32 %v538, %v488
        %v540 = vmax.f32 %v533, 2.0
        %v541 = vsub.f32 %v488, 2.0
        %v542 = vmax.f32 %v541, %v538
        %v543 = vmax.f32 %v540, %v542
        %v544 = vmax.f32 %v533, %v541
        %v545 = vmax.f32 %v544, %v538
        %v546 = vmin.f32 %v488, 2.7182817
        %v547 = vmul.f32 %v488, %v488
        %v548 = vrcp.pop %v547
        %v549 = vmul.f32 32.0, %v548
        %v550 = vsub.f32 1.0, %v549
        %v551 = vmax.f32 %v550, 0.0
        %v552 = vrsqrt.pop %v551
        %v553 = vmul.f32 %v551, %v552
        %vm554 = vcmp.eq.f32.partialorder %v551, inf
        %v555 = vsel %vm554, %v551, %v553
        %vm556 = vcmp.eq.f32.partialorder %v551, 0.0
        %v557 = vand.u32 %v551, 2147483648
        %v558 = vsel %vm556, %v557, %v555
        %v559 = vmul.f32 %v488, 0.25
        %v560 = vadd.f32 %v558, 1.0
        %v561 = vmul.f32 %v559, %v560
        %v562 = vmin.f32 %v539, %v561
        %v563 = vsub.f32 1.0, %v558
        %v564 = vmul.f32 %v559, %v563
        %v565 = vmax.f32 %v545, %v564
        %v566 = vlaneseq
        %v567 = vshrl.u32 %v566, 7
        %v568 = vadd.s32 %v567, 8
        %v569 = vadd.s32 %v567, 16
        %v570 = vadd.s32 %v567, 24
        %v571 = vadd.s32 %v567, 32
        %v572 = vadd.s32 %v567, 40
        %vm573 = vcmp.ge.s32.totalorder %v567, 24
        %vm574 = vcmp.ge.s32.totalorder %v568, 24
        %vm575 = vcmp.ge.s32.totalorder %v569, 24
        %vm576 = vcmp.ge.s32.totalorder %v570, 24
        %vm577 = vcmp.ge.s32.totalorder %v571, 24
        %vm578 = vcmp.ge.s32.totalorder %v572, 24
        %v579 = vlog2.pop %v463
        %v580 = vmul.f32 %v579, 0.6931472
        %v581 = vsub.f32 %v534, %v488
        %v582 = vsub.f32 %v536, %v488
        %v583 = vsub.f32 %v543, %v488
        %v584 = vsub.f32 %v545, %v488
        %v585 = vsub.f32 %v565, %v488
        %v586 = vmul.f32 %v581, 0.5
        %v587 = vmul.f32 %v582, 0.5
        %v588 = vmul.f32 %v583, 0.5
        %v589 = vmul.f32 %v584, 0.5
        %v590 = vmul.f32 %v585, 0.5
        %v591 = vmax.f32 %v586, -1.0
        %v592 = vmax.f32 %v587, -1.0
        %v593 = vmax.f32 %v588, -1.0
        %v594 = vmax.f32 %v589, -1.0
        %v595 = vmax.f32 %v590, -1.0
        %v596 = vmin.f32 %v591, 1.0
        %v597 = vmin.f32 %v592, 1.0
        %v598 = vmin.f32 %v593, 1.0
        %v599 = vmin.f32 %v594, 1.0
        %v600 = vmin.f32 %v595, 1.0
        %v601 = vmul.f32 %v596, 0.5
        %v602 = vmul.f32 %v597, 0.5
        %v603 = vmul.f32 %v598, 0.5
        %v604 = vmul.f32 %v599, 0.5
        %v605 = vmul.f32 %v600, 0.5
        %v606 = vlog2.pop %v534
        %v607 = vmul.f32 %v606, 0.6931472
        %v608 = vlog2.pop %v536
        %v609 = vmul.f32 %v608, 0.6931472
        %v610 = vlog2.pop %v543
        %v611 = vmul.f32 %v610, 0.6931472
        %v612 = vlog2.pop %v545
        %v613 = vmul.f32 %v612, 0.6931472
        %v614 = vlog2.pop %v565
        %v615 = vmul.f32 %v614, 0.6931472
        %v616 = vsub.f32 %v607, %v580
        %v617 = vsub.f32 %v609, %v580
        %v618 = vsub.f32 %v611, %v580
        %v619 = vsub.f32 %v613, %v580
        %v620 = vsub.f32 %v615, %v580
        %v621 = vmax.f32 %v616, -1.0
        %v622 = vmax.f32 %v617, -1.0
        %v623 = vmax.f32 %v618, -1.0
        %v624 = vmax.f32 %v619, -1.0
        %v625 = vmax.f32 %v620, -1.0
        %v626 = vmin.f32 %v621, 1.0
        %v627 = vmin.f32 %v622, 1.0
        %v628 = vmin.f32 %v623, 1.0
        %v629 = vmin.f32 %v624, 1.0
        %v630 = vmin.f32 %v625, 1.0
        %v631 = vrcp.pop %v534
        %v632 = vrcp.pop %v536
        %v633 = vrcp.pop %v543
        %v634 = vrcp.pop %v545
        %v635 = vrcp.pop %v565
        %v636 = vmul.f32 %v626, %v631
        %v637 = vmul.f32 %v627, %v632
        %v638 = vmul.f32 %v628, %v633
        %v639 = vmul.f32 %v629, %v634
        %v640 = vmul.f32 %v630, %v635
        %v641 = vadd.f32 %v601, %v636
        %v642 = vadd.f32 %v602, %v637
        %v643 = vadd.f32 %v603, %v638
        %v644 = vadd.f32 %v604, %v639
        %v645 = vadd.f32 %v605, %v640
        %v646 = vmul.f32 %v534, %v641
        %v647 = vmul.f32 %v536, %v642
        %v648 = vmul.f32 %v543, %v643
        %v649 = vmul.f32 %v545, %v644
        %v650 = vmul.f32 %v565, %v645
        %v651 = vsel %vm573, %v646, %v641
        %v652 = vsel %vm574, %v647, %v642
        %v653 = vsel %vm575, %v648, %v643
        %v654 = vsel %vm576, %v649, %v644
        %v655 = vsel %vm577, %v649, %v644
        %v656 = vsel %vm578, %v650, %v645
        %v657 = vsub.f32 %v463, %v488
        %v658 = vsub.f32 %v539, %v488
        %v659 = vsub.f32 %v488, %v488
        %v660 = vsub.f32 %v546, %v488
        %v661 = vsub.f32 %v562, %v488
        %v662 = vmul.f32 %v657, 0.5
        %v663 = vmul.f32 %v658, 0.5
        %v664 = vmul.f32 %v659, 0.5
        %v665 = vmul.f32 %v660, 0.5
        %v666 = vmul.f32 %v661, 0.5
        %v667 = vmax.f32 %v662, -1.0
        %v668 = vmax.f32 %v663, -1.0
        %v669 = vmax.f32 %v664, -1.0
        %v670 = vmax.f32 %v665, -1.0
        %v671 = vmax.f32 %v666, -1.0
        %v672 = vmin.f32 %v667, 1.0
        %v673 = vmin.f32 %v668, 1.0
        %v674 = vmin.f32 %v669, 1.0
        %v675 = vmin.f32 %v670, 1.0
        %v676 = vmin.f32 %v671, 1.0
        %v677 = vmul.f32 %v672, 0.5
        %v678 = vmul.f32 %v673, 0.5
        %v679 = vmul.f32 %v674, 0.5
        %v680 = vmul.f32 %v675, 0.5
        %v681 = vmul.f32 %v676, 0.5
        %v682 = vlog2.pop %v539
        %v683 = vmul.f32 %v682, 0.6931472
        %v684 = vlog2.pop %v488
        %v685 = vmul.f32 %v684, 0.6931472
        %v686 = vlog2.pop %v546
        %v687 = vmul.f32 %v686, 0.6931472
        %v688 = vlog2.pop %v562
        %v689 = vmul.f32 %v688, 0.6931472
        %v690 = vsub.f32 %v580, %v580
        %v691 = vsub.f32 %v683, %v580
        %v692 = vsub.f32 %v685, %v580
        %v693 = vsub.f32 %v687, %v580
        %v694 = vsub.f32 %v689, %v580
        %v695 = vmax.f32 %v690, -1.0
        %v696 = vmax.f32 %v691, -1.0
        %v697 = vmax.f32 %v692, -1.0
        %v698 = vmax.f32 %v693, -1.0
        %v699 = vmax.f32 %v694, -1.0
        %v700 = vmin.f32 %v695, 1.0
        %v701 = vmin.f32 %v696, 1.0
        %v702 = vmin.f32 %v697, 1.0
        %v703 = vmin.f32 %v698, 1.0
        %v704 = vmin.f32 %v699, 1.0
        %v705 = vrcp.pop %v463
        %v706 = vrcp.pop %v539
        %v707 = vrcp.pop %v488
        %v708 = vrcp.pop %v546
        %v709 = vrcp.pop %v562
        %v710 = vmul.f32 %v700, %v705
        %v711 = vmul.f32 %v701, %v706
        %v712 = vmul.f32 %v702, %v707
        %v713 = vmul.f32 %v703, %v708
        %v714 = vmul.f32 %v704, %v709
        %v715 = vadd.f32 %v677, %v710
        %v716 = vadd.f32 %v678, %v711
        %v717 = vadd.f32 %v679, %v712
        %v718 = vadd.f32 %v680, %v713
        %v719 = vadd.f32 %v681, %v714
        %v720 = vmul.f32 %v463, %v715
        %v721 = vmul.f32 %v539, %v716
        %v722 = vmul.f32 %v488, %v717
        %v723 = vmul.f32 %v546, %v718
        %v724 = vmul.f32 %v562, %v719
        %v725 = vsel %vm573, %v720, %v715
        %v726 = vsel %vm574, %v721, %v716
        %v727 = vsel %vm575, %v722, %v717
        %v728 = vsel %vm576, %v723, %v718
        %v729 = vsel %vm577, %v724, %v719
        %v730 = vsel %vm578, %v721, %v716
        %vm731 = vcmp.ge.f32.partialorder %v651, 0.0
        %vm732 = vcmp.ge.f32.partialorder %v652, 0.0
        %vm733 = vcmp.ge.f32.partialorder %v653, 0.0
        %vm734 = vcmp.ge.f32.partialorder %v654, 0.0
        %vm735 = vcmp.ge.f32.partialorder %v655, 0.0
        %vm736 = vcmp.ge.f32.partialorder %v656, 0.0
        %vm737 = vmxor %vm731, 1
        %vm738 = vmxor %vm732, 1
        %vm739 = vmxor %vm733, 1
        %vm740 = vmxor %vm734, 1
        %vm741 = vmxor %vm735, 1
        %vm742 = vmxor %vm736, 1
        %vm743 = vcmp.le.f32.partialorder %v725, 0.0
        %vm744 = vcmp.le.f32.partialorder %v726, 0.0
        %vm745 = vcmp.le.f32.partialorder %v727, 0.0
        %vm746 = vcmp.le.f32.partialorder %v728, 0.0
        %vm747 = vcmp.le.f32.partialorder %v729, 0.0
        %vm748 = vcmp.le.f32.partialorder %v730, 0.0
        %vm749 = vmand %vm737, %vm743
        %vm750 = vmand %vm738, %vm744
        %vm751 = vmand %vm739, %vm745
        %vm752 = vmand %vm740, %vm746
        %vm753 = vmand %vm741, %vm747
        %vm754 = vmand %vm742, %vm748
        %vm755 = vmor %vm731, %vm749
        %vm756 = vmor %vm732, %vm750
        %vm757 = vmor %vm733, %vm751
        %vm758 = vmor %vm734, %vm752
        %vm759 = vmor %vm735, %vm753
        %vm760 = vmor %vm736, %vm754
        %v761 = vsel %vm731, %v534, %v463
        %v762 = vsel %vm732, %v536, %v539
        %v763 = vsel %vm733, %v543, %v488
        %v764 = vsel %vm734, %v545, %v546
        %v765 = vsel %vm735, %v545, %v562
        %v766 = vsel %vm736, %v565, %v539
        %v767 = vsel %vm755, %v761, %v534
        %v768 = vsel %vm756, %v762, %v536
        %v769 = vsel %vm757, %v763, %v543
        %v770 = vsel %vm758, %v764, %v545
        %v771 = vsel %vm759, %v765, %v545
        %v772 = vsel %vm760, %v766, %v565
        %v773 = vsel %vm755, %v761, %v463
        %v774 = vsel %vm756, %v762, %v539
        %v775 = vsel %vm757, %v763, %v488
        %v776 = vsel %vm758, %v764, %v546
        %v777 = vsel %vm759, %v765, %v562
        %v778 = vsel %vm760, %v766, %v539
        loop: start=0, step=1, limit=40
        $region61: #{tpu_custom_call.1} parent=39 // loop_pre_header
          _
        $region62: #{tpu_custom_call.1} parent=39 // loop_header
          %s780 = sphi 0, %s784
          %p781 = scmp.ge.s32.totalorder %s780, 40
          %v785 = vphi %v767, %v929
          %v786 = vphi %v768, %v930
          %v787 = vphi %v769, %v931
          %v788 = vphi %v770, %v932
          %v789 = vphi %v771, %v933
          %v790 = vphi %v772, %v934
          %v791 = vphi %v773, %v935
          %v792 = vphi %v774, %v936
          %v793 = vphi %v775, %v937
          %v794 = vphi %v776, %v938
          %v795 = vphi %v777, %v939
          %v796 = vphi %v778, %v940
        $region63: #{tpu_custom_call.1} parent=39 // loop_header_branch
          %783 = sbr.rel (%p781) target = $region67
        $region64: #{tpu_custom_call.1} parent=39 // loop_body
          %v797 = vsub.f32 %v791, %v785
          %v798 = vsub.f32 %v792, %v786
          %v799 = vsub.f32 %v793, %v787
          %v800 = vsub.f32 %v794, %v788
          %v801 = vsub.f32 %v795, %v789
          %v802 = vsub.f32 %v796, %v790
          %vm803 = vcmp.lt.f32.partialorder %v797, 0.1
          %vm804 = vcmp.lt.f32.partialorder %v798, 0.1
          %vm805 = vcmp.lt.f32.partialorder %v799, 0.1
          %vm806 = vcmp.lt.f32.partialorder %v800, 0.1
          %vm807 = vcmp.lt.f32.partialorder %v801, 0.1
          %vm808 = vcmp.lt.f32.partialorder %v802, 0.1
          %v809 = vadd.f32 %v785, %v791
          %v810 = vadd.f32 %v786, %v792
          %v811 = vadd.f32 %v787, %v793
          %v812 = vadd.f32 %v788, %v794
          %v813 = vadd.f32 %v789, %v795
          %v814 = vadd.f32 %v790, %v796
          %v815 = vmul.f32 %v809, 0.5
          %v816 = vmul.f32 %v810, 0.5
          %v817 = vmul.f32 %v811, 0.5
          %v818 = vmul.f32 %v812, 0.5
          %v819 = vmul.f32 %v813, 0.5
          %v820 = vmul.f32 %v814, 0.5
          %v821 = vsub.f32 %v815, %v488
          %v822 = vsub.f32 %v816, %v488
          %v823 = vsub.f32 %v817, %v488
          %v824 = vsub.f32 %v818, %v488
          %v825 = vsub.f32 %v819, %v488
          %v826 = vsub.f32 %v820, %v488
          %v827 = vmul.f32 %v821, 0.5
          %v828 = vmul.f32 %v822, 0.5
          %v829 = vmul.f32 %v823, 0.5
          %v830 = vmul.f32 %v824, 0.5
          %v831 = vmul.f32 %v825, 0.5
          %v832 = vmul.f32 %v826, 0.5
          %v833 = vmax.f32 %v827, -1.0
          %v834 = vmax.f32 %v828, -1.0
          %v835 = vmax.f32 %v829, -1.0
          %v836 = vmax.f32 %v830, -1.0
          %v837 = vmax.f32 %v831, -1.0
          %v838 = vmax.f32 %v832, -1.0
          %v839 = vmin.f32 %v833, 1.0
          %v840 = vmin.f32 %v834, 1.0
          %v841 = vmin.f32 %v835, 1.0
          %v842 = vmin.f32 %v836, 1.0
          %v843 = vmin.f32 %v837, 1.0
          %v844 = vmin.f32 %v838, 1.0
          %v845 = vmul.f32 %v839, 0.5
          %v846 = vmul.f32 %v840, 0.5
          %v847 = vmul.f32 %v841, 0.5
          %v848 = vmul.f32 %v842, 0.5
          %v849 = vmul.f32 %v843, 0.5
          %v850 = vmul.f32 %v844, 0.5
          %v851 = vlog2.pop %v815
          %v852 = vmul.f32 %v851, 0.6931472
          %v853 = vlog2.pop %v816
          %v854 = vmul.f32 %v853, 0.6931472
          %v855 = vlog2.pop %v817
          %v856 = vmul.f32 %v855, 0.6931472
          %v857 = vlog2.pop %v818
          %v858 = vmul.f32 %v857, 0.6931472
          %v859 = vlog2.pop %v819
          %v860 = vmul.f32 %v859, 0.6931472
          %v861 = vlog2.pop %v820
          %v862 = vmul.f32 %v861, 0.6931472
          %v863 = vsub.f32 %v852, %v580
          %v864 = vsub.f32 %v854, %v580
          %v865 = vsub.f32 %v856, %v580
          %v866 = vsub.f32 %v858, %v580
          %v867 = vsub.f32 %v860, %v580
          %v868 = vsub.f32 %v862, %v580
          %v869 = vmax.f32 %v863, -1.0
          %v870 = vmax.f32 %v864, -1.0
          %v871 = vmax.f32 %v865, -1.0
          %v872 = vmax.f32 %v866, -1.0
          %v873 = vmax.f32 %v867, -1.0
          %v874 = vmax.f32 %v868, -1.0
          %v875 = vmin.f32 %v869, 1.0
          %v876 = vmin.f32 %v870, 1.0
          %v877 = vmin.f32 %v871, 1.0
          %v878 = vmin.f32 %v872, 1.0
          %v879 = vmin.f32 %v873, 1.0
          %v880 = vmin.f32 %v874, 1.0
          %v881 = vrcp.pop %v815
          %v882 = vrcp.pop %v816
          %v883 = vrcp.pop %v817
          %v884 = vrcp.pop %v818
          %v885 = vrcp.pop %v819
          %v886 = vrcp.pop %v820
          %v887 = vmul.f32 %v875, %v881
          %v888 = vmul.f32 %v876, %v882
          %v889 = vmul.f32 %v877, %v883
          %v890 = vmul.f32 %v878, %v884
          %v891 = vmul.f32 %v879, %v885
          %v892 = vmul.f32 %v880, %v886
          %v893 = vadd.f32 %v845, %v887
          %v894 = vadd.f32 %v846, %v888
          %v895 = vadd.f32 %v847, %v889
          %v896 = vadd.f32 %v848, %v890
          %v897 = vadd.f32 %v849, %v891
          %v898 = vadd.f32 %v850, %v892
          %v899 = vmul.f32 %v815, %v893
          %v900 = vmul.f32 %v816, %v894
          %v901 = vmul.f32 %v817, %v895
          %v902 = vmul.f32 %v818, %v896
          %v903 = vmul.f32 %v819, %v897
          %v904 = vmul.f32 %v820, %v898
          %v905 = vsel %vm573, %v899, %v893
          %v906 = vsel %vm574, %v900, %v894
          %v907 = vsel %vm575, %v901, %v895
          %v908 = vsel %vm576, %v902, %v896
          %v909 = vsel %vm577, %v903, %v897
          %v910 = vsel %vm578, %v904, %v898
          %vm911 = vcmp.ge.f32.partialorder %v905, 0.0
          %vm912 = vcmp.ge.f32.partialorder %v906, 0.0
          %vm913 = vcmp.ge.f32.partialorder %v907, 0.0
          %vm914 = vcmp.ge.f32.partialorder %v908, 0.0
          %vm915 = vcmp.ge.f32.partialorder %v909, 0.0
          %vm916 = vcmp.ge.f32.partialorder %v910, 0.0
          %v917 = vsel %vm911, %v785, %v815
          %v918 = vsel %vm912, %v786, %v816
          %v919 = vsel %vm913, %v787, %v817
          %v920 = vsel %vm914, %v788, %v818
          %v921 = vsel %vm915, %v789, %v819
          %v922 = vsel %vm916, %v790, %v820
          %v923 = vsel %vm911, %v815, %v791
          %v924 = vsel %vm912, %v816, %v792
          %v925 = vsel %vm913, %v817, %v793
          %v926 = vsel %vm914, %v818, %v794
          %v927 = vsel %vm915, %v819, %v795
          %v928 = vsel %vm916, %v820, %v796
          %v929 = vsel %vm803, %v785, %v917
          %v930 = vsel %vm804, %v786, %v918
          %v931 = vsel %vm805, %v787, %v919
          %v932 = vsel %vm806, %v788, %v920
          %v933 = vsel %vm807, %v789, %v921
          %v934 = vsel %vm808, %v790, %v922
          %v935 = vsel %vm803, %v791, %v923
          %v936 = vsel %vm804, %v792, %v924
          %v937 = vsel %vm805, %v793, %v925
          %v938 = vsel %vm806, %v794, %v926
          %v939 = vsel %vm807, %v795, %v927
          %v940 = vsel %vm808, %v796, %v928
        $region65: #{tpu_custom_call.1} parent=39 // loop_footer
          %s784 = sadd.s32 1, %s780
        $region66: #{tpu_custom_call.1} parent=39 // loop_footer_branch
          %779 = sbr.rel target = $region62
        $region67: #{tpu_custom_call.1} parent=39 // loop_exit
          _
        %v941 = vadd.f32 %v785, %v791
        %v942 = vadd.f32 %v786, %v792
        %v943 = vadd.f32 %v787, %v793
        %v944 = vadd.f32 %v788, %v794
        %v945 = vadd.f32 %v789, %v795
        %v946 = vadd.f32 %v790, %v796
        %v947 = vmul.f32 %v941, 0.5
        %v948 = vmul.f32 %v942, 0.5
        %v949 = vmul.f32 %v943, 0.5
        %v950 = vmul.f32 %v944, 0.5
        %v951 = vmul.f32 %v945, 0.5
        %v952 = vmul.f32 %v946, 0.5
        %v953 = vsub.f32 %v533, %v488
        %v954 = vsub.f32 %v948, %v488
        %v955 = vsub.f32 %v949, %v488
        %v956 = vsub.f32 %v950, %v488
        %v957 = vsub.f32 %v951, %v488
        %v958 = vsub.f32 %v952, %v488
        %v959 = vmul.f32 %v953, 0.5
        %v960 = vmul.f32 %v954, 0.5
        %v961 = vmul.f32 %v955, 0.5
        %v962 = vmul.f32 %v956, 0.5
        %v963 = vmul.f32 %v957, 0.5
        %v964 = vmul.f32 %v958, 0.5
        %v965 = vand.u32 2147483647, %v959
        %v966 = vand.u32 2147483647, %v664
        %v967 = vand.u32 2147483647, %v960
        %v968 = vand.u32 2147483647, %v961
        %v969 = vand.u32 2147483647, %v962
        %v970 = vand.u32 2147483647, %v963
        %v971 = vand.u32 2147483647, %v964
        %vm972 = vcmp.lt.f32.partialorder %v965, 1.0
        %vm973 = vcmp.lt.f32.partialorder %v966, 1.0
        %vm974 = vcmp.lt.f32.partialorder %v967, 1.0
        %vm975 = vcmp.lt.f32.partialorder %v968, 1.0
        %vm976 = vcmp.lt.f32.partialorder %v969, 1.0
        %vm977 = vcmp.lt.f32.partialorder %v970, 1.0
        %vm978 = vcmp.lt.f32.partialorder %v971, 1.0
        %v979 = vmul.f32 %v965, 0.5
        %v980 = vmul.f32 %v966, 0.5
        %v981 = vmul.f32 %v967, 0.5
        %v982 = vmul.f32 %v968, 0.5
        %v983 = vmul.f32 %v969, 0.5
        %v984 = vmul.f32 %v970, 0.5
        %v985 = vmul.f32 %v971, 0.5
        %v986 = vmul.f32 %v979, %v965
        %v987 = vmul.f32 %v980, %v966
        %v988 = vmul.f32 %v981, %v967
        %v989 = vmul.f32 %v982, %v968
        %v990 = vmul.f32 %v983, %v969
        %v991 = vmul.f32 %v984, %v970
        %v992 = vmul.f32 %v985, %v971
        %v993 = vsub.f32 %v965, 0.5
        %v994 = vsub.f32 %v966, 0.5
        %v995 = vsub.f32 %v967, 0.5
        %v996 = vsub.f32 %v968, 0.5
        %v997 = vsub.f32 %v969, 0.5
        %v998 = vsub.f32 %v970, 0.5
        %v999 = vsub.f32 %v971, 0.5
        %v1000 = vsel %vm972, %v986, %v993
        %v1001 = vsel %vm973, %v987, %v994
        %v1002 = vsel %vm974, %v988, %v995
        %v1003 = vsel %vm975, %v989, %v996
        %v1004 = vsel %vm976, %v990, %v997
        %v1005 = vsel %vm977, %v991, %v998
        %v1006 = vsel %vm978, %v992, %v999
        %v1007 = vlog2.pop %v533
        %v1008 = vmul.f32 %v1007, 0.6931472
        %v1009 = vlog2.pop %v948
        %v1010 = vmul.f32 %v1009, 0.6931472
        %v1011 = vlog2.pop %v949
        %v1012 = vmul.f32 %v1011, 0.6931472
        %v1013 = vlog2.pop %v950
        %v1014 = vmul.f32 %v1013, 0.6931472
        %v1015 = vlog2.pop %v951
        %v1016 = vmul.f32 %v1015, 0.6931472
        %v1017 = vlog2.pop %v952
        %v1018 = vmul.f32 %v1017, 0.6931472
        %v1019 = vsub.f32 %v1008, %v580
        %v1020 = vsub.f32 %v1010, %v580
        %v1021 = vsub.f32 %v1012, %v580
        %v1022 = vsub.f32 %v1014, %v580
        %v1023 = vsub.f32 %v1016, %v580
        %v1024 = vsub.f32 %v1018, %v580
        %v1025 = vand.u32 2147483647, %v1019
        %v1026 = vand.u32 2147483647, %v692
        %v1027 = vand.u32 2147483647, %v1020
        %v1028 = vand.u32 2147483647, %v1021
        %v1029 = vand.u32 2147483647, %v1022
        %v1030 = vand.u32 2147483647, %v1023
        %v1031 = vand.u32 2147483647, %v1024
        %vm1032 = vcmp.lt.f32.partialorder %v1025, 1.0
        %vm1033 = vcmp.lt.f32.partialorder %v1026, 1.0
        %vm1034 = vcmp.lt.f32.partialorder %v1027, 1.0
        %vm1035 = vcmp.lt.f32.partialorder %v1028, 1.0
        %vm1036 = vcmp.lt.f32.partialorder %v1029, 1.0
        %vm1037 = vcmp.lt.f32.partialorder %v1030, 1.0
        %vm1038 = vcmp.lt.f32.partialorder %v1031, 1.0
        %v1039 = vmul.f32 %v1025, 0.5
        %v1040 = vmul.f32 %v1026, 0.5
        %v1041 = vmul.f32 %v1027, 0.5
        %v1042 = vmul.f32 %v1028, 0.5
        %v1043 = vmul.f32 %v1029, 0.5
        %v1044 = vmul.f32 %v1030, 0.5
        %v1045 = vmul.f32 %v1031, 0.5
        %v1046 = vmul.f32 %v1039, %v1025
        %v1047 = vmul.f32 %v1040, %v1026
        %v1048 = vmul.f32 %v1041, %v1027
        %v1049 = vmul.f32 %v1042, %v1028
        %v1050 = vmul.f32 %v1043, %v1029
        %v1051 = vmul.f32 %v1044, %v1030
        %v1052 = vmul.f32 %v1045, %v1031
        %v1053 = vsub.f32 %v1025, 0.5
        %v1054 = vsub.f32 %v1026, 0.5
        %v1055 = vsub.f32 %v1027, 0.5
        %v1056 = vsub.f32 %v1028, 0.5
        %v1057 = vsub.f32 %v1029, 0.5
        %v1058 = vsub.f32 %v1030, 0.5
        %v1059 = vsub.f32 %v1031, 0.5
        %v1060 = vsel %vm1032, %v1046, %v1053
        %v1061 = vsel %vm1033, %v1047, %v1054
        %v1062 = vsel %vm1034, %v1048, %v1055
        %v1063 = vsel %vm1035, %v1049, %v1056
        %v1064 = vsel %vm1036, %v1050, %v1057
        %v1065 = vsel %vm1037, %v1051, %v1058
        %v1066 = vsel %vm1038, %v1052, %v1059
        %v1067 = vadd.f32 %v1000, %v1060
        %v1068 = vadd.f32 %v1001, %v1061
        %v1069 = vadd.f32 %v1002, %v1062
        %v1070 = vadd.f32 %v1003, %v1063
        %v1071 = vadd.f32 %v1004, %v1064
        %v1072 = vadd.f32 %v1005, %v1065
        %v1073 = vadd.f32 %v1006, %v1066
        %vm1074 = vcmp.le.f32.partialorder %v488, 5.656854
        %vm1075 = vmxor %vm1074, 1
        %vm1076 = vcmp.lt.f32.partialorder %v1068, %v1067
        %v1077 = vsel %vm1076, %v488, %v533
        %v1078 = vsel %vm1076, %v1068, %v1067
        %vm1079 = vcmp.lt.f32.partialorder %v1069, %v1078
        %v1080 = vsel %vm1079, %v948, %v1077
        %v1081 = vsel %vm1079, %v1069, %v1078
        %vm1082 = vcmp.lt.f32.partialorder %v1070, %v1081
        %v1083 = vsel %vm1082, %v949, %v1080
        %v1084 = vsel %vm1082, %v1070, %v1081
        %vm1085 = vcmp.lt.f32.partialorder %v1071, %v1084
        %vm1086 = vmand %vm1074, %vm1085
        %v1087 = vsel %vm1086, %v950, %v1083
        %v1088 = vsel %vm1086, %v1071, %v1084
        %vm1089 = vcmp.lt.f32.partialorder %v1072, %v1088
        %vm1090 = vmand %vm1075, %vm1089
        %v1091 = vsel %vm1090, %v951, %v1087
        %v1092 = vsel %vm1090, %v1072, %v1088
        %vm1093 = vcmp.lt.f32.partialorder %v1073, %v1092
        %vm1094 = vmand %vm1075, %vm1093
        %v1095 = vsel %vm1094, %v952, %v1091
        %v1096 = vsel %vm537, %v1095, %v533
        %v1097 = vsel %vm535, %v947, %v1096
        %v1098 = vsub.f32 %v1097, %v488
        %v1099 = vmul.f32 %v1098, 0.5
        %v1100 = vand.u32 2147483647, %v1099
        %vm1101 = vcmp.lt.f32.partialorder %v1100, 1.0
        %v1102 = vmul.f32 %v1100, 0.5
        %v1103 = vmul.f32 %v1102, %v1100
        %v1104 = vsub.f32 %v1100, 0.5
        %v1105 = vsel %vm1101, %v1103, %v1104
        %v1106 = vlog2.pop %v1097
        %v1107 = vmul.f32 %v1106, 0.6931472
        %v1108 = vsub.f32 %v1107, %v580
        %v1109 = vand.u32 2147483647, %v1108
        %vm1110 = vcmp.lt.f32.partialorder %v1109, 1.0
        %v1111 = vmul.f32 %v1109, 0.5
        %v1112 = vmul.f32 %v1111, %v1109
        %v1113 = vsub.f32 %v1109, 0.5
        %v1114 = vsel %vm1110, %v1112, %v1113
        %v1115 = vadd.f32 %v1105, %v1114
        %v1116 = vmul.f32 %v1097, 0.5
        %v1117 = vadd.f32 %v423, %v1116
        %v1119 = vrot.slane %v1116, 1
        %v1121 = vsub.f32 %v430, %v1119
        %v1123 = vrot.slane %v1115, 1
        %vm1125 = vcmp.le.f32.partialorder %v1115, %v1123
        %v1126 = vrot.slane %v1116, 2
        %v1128 = vadd.f32 %v429, %v1126
        %v1129 = vrot.slane %v1116, 3
        %v1131 = vsub.f32 %v425, %v1129
        %v1133 = vrot.slane %v1128, 6
        %v1136 = vrot.slane %v1131, 6
        %v1138 = vsel %vm1125, %v1133, %v1136
        %v1140 = vrot.slane %v1097, 1
        %v1142 = vsel %vm1125, %v1097, %v1140
        %v1143 = vmax.f32 %v434, %v436
        %v1145 = vrot.slane %v1143, 6
        %vm1147 = vcmp.ge.f32.partialorder %v417, %v1145
        %v1149 = vrot.slane %v382, 6
        %v1151 = vsel %vm1147, %v1149, %v1138
        %v1152 = vsel %vm1147, %v417, %v1142
        %vm1153 = vcmp.gt.f32.partialorder %v385, 0.5
        %vm1154 = vmxor %vm1153, 1
        %v1155 = vsel %vm1154, 1, 0
        %v1156 = vrot.slane %v1155, 1
        %vm1157 = vcmp.ne.s32.totalorder %v1156, 0
        %vm1158 = vmand %vm1154, %vm1157
        %v1159 = vsel %vm1153, 1, 0
        %v1160 = vrot.slane %v1159, 1
        %vm1161 = vcmp.ne.s32.totalorder %v1160, 0
        %vm1162 = vmand %vm1154, %vm1161
        %vm1163 = vmand %vm1153, %vm1157
        %v1165 = vrot.slane %v1151, 2
        %v1167 = vsel %vm1163, %v1121, %v1165
        %v1168 = vsel %vm1162, %v1117, %v1167
        %v1169 = vsel %vm1158, %v410, %v1168
        %v1171 = vrot.slane %v1152, 2
        %v1173 = vsel %vm1163, %v1140, %v1171
        %v1174 = vsel %vm1162, %v1097, %v1173
        %v1176 = vrot.slane %v412, 2
        %v1178 = vsel %vm1158, %v1176, %v1174
        %v1179 = vadd.f32 %v423, %v1129
        %v1180 = vrot.slane %v1116, 4
        %v1182 = vsub.f32 %v430, %v1180
        %v1183 = vrot.slane %v1116, 5
        %v1185 = vadd.f32 %v429, %v1183
        %v1186 = vrot.slane %v1116, 6
        %v1188 = vsub.f32 %v425, %v1186
        %v1190 = vrot.slane %v1185, 3
        %v1193 = vrot.slane %v1188, 3
        %v1195 = vsel %vm1125, %v1190, %v1193
        %v1197 = vrot.slane %v1195, 3
        %v1199 = vsel %vm1147, %v1149, %v1197
        %v1201 = vrot.slane %v1142, 3
        %v1203 = vsel %vm1147, %v417, %v1201
        %v1205 = vrot.slane %v1182, 7
        %v1208 = vrot.slane %v1199, 1
        %v1210 = vsel %vm1163, %v1205, %v1208
        %v1212 = vrot.slane %v1179, 7
        %v1214 = vsel %vm1162, %v1212, %v1210
        %v1216 = vrot.slane %v410, 7
        %v1218 = vsel %vm1158, %v1216, %v1214
        %v1219 = vrot.slane %v1097, 3
        %v1222 = vrot.slane %v1203, 1
        %v1224 = vsel %vm1163, %v1219, %v1222
        %v1225 = vrot.slane %v1097, 2
        %v1227 = vsel %vm1162, %v1225, %v1224
        %v1228 = vrot.slane %v412, 1
        %v1230 = vsel %vm1158, %v1228, %v1227
        %v1232 = vrot.slane %v1178, 6
        %v1235 = vrot.slane %v1230, 7
        %v1237 = vsel %vm452, %v438, %v1232
        %v1238 = vsel %vm454, %v1237, %v1235
        %v1239 = vlog2.pop %v1238
        %v1240 = vmul.f32 %v1239, 0.6931472
        %v1242 = vrot.slane %v1240, 6
        %v1244 = vsel %vm452, %v382, %v1242
        %v1245 = vsel %vm454, %v1244, %v1242
        %v1247 = vrot.slane %v1218, 1
        %v1249 = vsel %vm450, %v1169, %v1247
        %v1250 = vsel %vm452, %v1249, %v1240
        %v1251 = vsel %vm454, %v1250, %v1240
        %v1252 = vsub.f32 %v1245, %v1251
        %v1253 = vand.u32 2147483647, %v1252
        %vm1254 = vcmp.lt.f32.partialorder %v1253, 1.0
        %v1255 = vmul.f32 %v1253, %v1253
        %v1256 = vmul.f32 %v1255, 0.5
        %v1257 = vsub.f32 %v1253, 0.5
        %v1258 = vsel %vm1254, %v1256, %v1257
        %vm1259 = vcmp.ge.s32.totalorder %v567, 2
        %vm1260 = vcmp.ge.f32.partialorder %v1258, 100.0
        %vm1261 = vmand %vm1259, %vm1260
        %v1262 = vsel %vm1261, 100.0, %v1258
        %v1263 = vsel %vm456, %v1262, 0.0
        %1264 = vst [vmem:[%s381] sm:$0xff] %v1263
        %s1265 = sand.u32 %s166, 1
        %s1266 = scalar_lea.sflag [#allocation4], %s1265
        %s1267 = sand.u32 %s166, 1
        %s1268 = smul.addr %s1267, 8
        %s1269 = scalar_lea.vmem [#allocation11], %s1268
        // Predicated region
        $region68: #{tpu_custom_call.1} parent=39 // pred_check
          %p1270 = pneg %p176
        $region69: #{tpu_custom_call.1} parent=39 // pred_check_branch
          %1272 = sbr.rel (%p1270) target = $region71
        $region70: #{tpu_custom_call.1} parent=39 // pred_region
          %s1274 = ssub.s32 128, 128
          %1275 = vsyncadd %s1266, %s1274
          %s1276 = smul.addr %s28, 128
          %s1277 = scalar_lea.hbm %s5, %s1276
          %s1279 = sshll.u32 %s1269, 4
          %s1280 = int_to_ptr.vmem [resolvable:$true] %s1279
          %1282 = dma.vmem_to_hbm [thread:$0]  %s1280, 128, %s1277, %s1266
        $region71: #{tpu_custom_call.1} parent=39 // pred_fallthru
          _
      $region40: #{tpu_custom_call.1} parent=5 // pred_fallthru
        _
      %p1283 = scmp.le.s32.totalorder 2, %s23
      // Predicated region
      $region72: #{tpu_custom_call.1} parent=5 // pred_check
        %p1284 = pneg %p1283
      $region73: #{tpu_custom_call.1} parent=5 // pred_check_branch
        %1286 = sbr.rel (%p1284) target = $region75
      $region74: #{tpu_custom_call.1} parent=5 // pred_region
        %s1287 = ssub.s32 %s23, 2
        // Predicated region
        $region76: #{tpu_custom_call.1} parent=74 // pred_check
          %p1288 = pneg %p182
        $region77: #{tpu_custom_call.1} parent=74 // pred_check_branch
          %1290 = sbr.rel (%p1288) target = $region79
        $region78: #{tpu_custom_call.1} parent=74 // pred_region
          %s1291 = sand.u32 %s167, 1
          %s1292 = scalar_lea.sflag [#allocation4], %s1291
          %s1293 = sand.u32 %s167, 1
          %s1294 = smul.addr %s1293, 8
          %s1295 = scalar_lea.vmem [#allocation11], %s1294
          %1296 = dma.done %s1292, 128
        $region79: #{tpu_custom_call.1} parent=74 // pred_fallthru
          _
      $region75: #{tpu_custom_call.1} parent=5 // pred_fallthru
        _
    $region6: #{tpu_custom_call.1} parent=1 // loop_footer
      %s27 = sadd.s32 1, %s23
    $region7: #{tpu_custom_call.1} parent=1 // loop_footer_branch
      %22 = sbr.rel target = $region3
    $region8: #{tpu_custom_call.1} parent=1 // loop_exit
      _
    %1297 = vsyncpa [#allocation3], 1
    %s1298 = scalar_lea.sflag [#allocation3], 1
    %1299 = vsyncpa %s1298, 1
    %1300 = vsyncpa [#allocation6], 1
    %s1301 = scalar_lea.sflag [#allocation6], 1
    %1302 = vsyncpa %s1301, 1
    %1303 = vsyncpa [#allocation9], 1
    %s1304 = scalar_lea.sflag [#allocation9], 1
    %1305 = vsyncpa %s1304, 1
    %1306 = vsyncpa [#allocation4], 1
    %s1307 = scalar_lea.sflag [#allocation4], 1
    %1308 = vsyncpa %s1307, 1

</llo_original>
